<compile_context>
chip_gen: v5e
topology: v5e:2x2
jax: 0.10.0
libtpu: 0.0.40
codegen_flags: <defaults>
</compile_context>

<pallas_src>
import functools
import math

import jax
import jax.numpy as jnp
from jax import lax
from jax.experimental import pallas as pl
from jax.experimental.pallas import tpu as pltpu


def _layernorm(x, g, b, eps=1e-5):
    mu = jnp.mean(x, axis=-1, keepdims=True)
    var = jnp.mean((x - mu) ** 2, axis=-1, keepdims=True)
    return (x - mu) * lax.rsqrt(var + eps) * g + b


def encoder_layer_kernel(src_q_ref, src_kv_ref, pos_q_ref, pos_kv_ref,
                         wqkv_ref, bqkv_ref, wo_ref, bo_ref,
                         ln1g_ref, ln1b_ref, ln2g_ref, ln2b_ref,
                         w1_ref, b1_ref, w2_ref, b2_ref,
                         *rest, d_model, nhead, ff_chunk, fuse_final_norm):
    if fuse_final_norm:
        lnfg_ref, lnfb_ref, out_ref, attn_scr = rest
    else:
        out_ref, attn_scr = rest

    bf16 = jnp.bfloat16
    hd = d_model // nhead
    scale = 1.0 / math.sqrt(hd)

    src_q = src_q_ref[0]                          # (TQ, D) f32  — residual / query rows
    src_kv = src_kv_ref[0]                        # (S,  D) f32  — full sequence for K/V
    q_in = (src_q + pos_q_ref[0]).astype(bf16)
    k_in = (src_kv + pos_kv_ref[0]).astype(bf16)
    v_in = src_kv.astype(bf16)

    wqkv = wqkv_ref[...]                          # (D, 3D) bf16
    bqkv = bqkv_ref[...]                          # (1, 3D) f32
    q = (jnp.dot(q_in, wqkv[:, 0:d_model],
                 preferred_element_type=jnp.float32) + bqkv[:, 0:d_model]).astype(bf16)
    k = (jnp.dot(k_in, wqkv[:, d_model:2 * d_model],
                 preferred_element_type=jnp.float32) + bqkv[:, d_model:2 * d_model]).astype(bf16)
    v = (jnp.dot(v_in, wqkv[:, 2 * d_model:3 * d_model],
                 preferred_element_type=jnp.float32) + bqkv[:, 2 * d_model:3 * d_model]).astype(bf16)

    # Per-head attention (static unroll). No transpose (dot_general contracts dim 1 of both)
    # and no concatenate: each head's context is written into its lane slice of the scratch.
    for h in range(nhead):
        sl = slice(h * hd, (h + 1) * hd)
        logits = lax.dot_general(
            q[:, sl], k[:, sl],
            dimension_numbers=(((1,), (1,)), ((), ())),
            preferred_element_type=jnp.float32) * scale        # (TQ, S) f32
        m = jnp.max(logits, axis=-1, keepdims=True)
        p = jnp.exp(logits - m)
        denom = jnp.sum(p, axis=-1, keepdims=True)
        p = p * pl.reciprocal(denom, approx=True)
        attn_scr[:, sl] = jnp.dot(p.astype(bf16), v[:, sl],
                                  preferred_element_type=jnp.float32)

    attn = jnp.dot(attn_scr[...].astype(bf16), wo_ref[...],
                   preferred_element_type=jnp.float32) + bo_ref[...]

    x = _layernorm(src_q + attn, ln1g_ref[...], ln1b_ref[...])

    # FFN with hidden-dim chunking: bounds the live (TQ, FF) hidden at real DETR sizes.
    x_bf = x.astype(bf16)
    y = jnp.zeros_like(x)
    ff = w1_ref.shape[1]
    for c in range(0, ff, ff_chunk):
        hid = jnp.dot(x_bf, w1_ref[:, c:c + ff_chunk],
                      preferred_element_type=jnp.float32) + b1_ref[:, c:c + ff_chunk]
        hid = jnp.maximum(hid, 0.0)
        y = y + jnp.dot(hid.astype(bf16), w2_ref[c:c + ff_chunk, :],
                        preferred_element_type=jnp.float32)
    y = y + b2_ref[...]

    x = _layernorm(x + y, ln2g_ref[...], ln2b_ref[...])
    if fuse_final_norm:
        x = _layernorm(x, lnfg_ref[...], lnfb_ref[...])
    out_ref[0] = x


def run_encoder_layer(src, pos, params, d_model, nhead, *,
                      q_tile=256, ff_chunk=512, final_norm=None):
    B, S, D = src.shape
    FF = params["w1"].shape[1]
    tq = min(q_tile, S)
    assert S % tq == 0, "sequence length must be a multiple of the query tile"
    ffc = min(ff_chunk, FF)
    assert FF % ffc == 0, "ffn dim must be a multiple of the ffn chunk"
    fuse = final_norm is not None

    kernel = functools.partial(encoder_layer_kernel, d_model=d_model, nhead=nhead,
                               ff_chunk=ffc, fuse_final_norm=fuse)

    def qtile_spec():
        return pl.BlockSpec((1, tq, D), lambda b, t: (b, t, 0))

    def full_seq_spec():
        return pl.BlockSpec((1, S, D), lambda b, t: (b, 0, 0))

    def const_spec(shape):
        nd = len(shape)
        # Block index never changes across the grid -> single buffer (halves weight VMEM).
        return pl.BlockSpec(shape, lambda b, t: (0,) * nd,
                            pipeline_mode=pl.Buffered(1))

    in_specs = [
        qtile_spec(), full_seq_spec(),        # src (query rows), src (full seq for K/V)
        qtile_spec(), full_seq_spec(),        # pos (query rows), pos (full seq for K)
        const_spec((D, 3 * D)), const_spec((1, 3 * D)),
        const_spec((D, D)), const_spec((1, D)),
        const_spec((1, D)), const_spec((1, D)),
        const_spec((1, D)), const_spec((1, D)),
        const_spec((D, FF)), const_spec((1, FF)),
        const_spec((FF, D)), const_spec((1, D)),
    ]
    args = [src, src, pos, pos,
            params["wqkv"], params["bqkv"], params["wo"], params["bo"],
            params["ln1g"], params["ln1b"], params["ln2g"], params["ln2b"],
            params["w1"], params["b1"], params["w2"], params["b2"]]
    if fuse:
        in_specs += [const_spec((1, D)), const_spec((1, D))]
        args += [final_norm["g"], final_norm["b"]]

    return pl.pallas_call(
        kernel,
        out_shape=jax.ShapeDtypeStruct((B, S, D), jnp.float32),
        grid=(B, S // tq),
        in_specs=in_specs,
        out_specs=pl.BlockSpec((1, tq, D), lambda b, t: (b, t, 0)),
        scratch_shapes=[pltpu.VMEM((tq, D), jnp.float32)],
        compiler_params=pltpu.CompilerParams(
            dimension_semantics=("parallel", "parallel"),
            vmem_limit_bytes=64 * 1024 * 1024),
    )(*args)


def transformer_encoder(src, pos, layer_params, final_norm, d_model, nhead):
    assert len(layer_params) >= 1
    out = src
    last = len(layer_params) - 1
    for i, p in enumerate(layer_params):
        out = run_encoder_layer(out, pos, p, d_model, nhead,
                                final_norm=final_norm if i == last else None)
    return out


def _make_layer_params(key, d_model, ff):
    ks = jax.random.split(key, 4)
    scale = 0.05
    bf16 = jnp.bfloat16
    return {
        # Matmul weights stored in bf16 (MXU-native); biases / LN params stay f32.
        "wqkv": (scale * jax.random.normal(ks[0], (d_model, 3 * d_model), jnp.float32)).astype(bf16),
        "bqkv": jnp.zeros((1, 3 * d_model), jnp.float32),
        "wo":   (scale * jax.random.normal(ks[1], (d_model, d_model), jnp.float32)).astype(bf16),
        "bo":   jnp.zeros((1, d_model), jnp.float32),
        "ln1g": jnp.ones((1, d_model), jnp.float32),
        "ln1b": jnp.zeros((1, d_model), jnp.float32),
        "ln2g": jnp.ones((1, d_model), jnp.float32),
        "ln2b": jnp.zeros((1, d_model), jnp.float32),
        "w1":   (scale * jax.random.normal(ks[2], (d_model, ff), jnp.float32)).astype(bf16),
        "b1":   jnp.zeros((1, ff), jnp.float32),
        "w2":   (scale * jax.random.normal(ks[3], (ff, d_model), jnp.float32)).astype(bf16),
        "b2":   jnp.zeros((1, d_model), jnp.float32),
    }


if __name__ == "__main__":
    B, S, D, NHEAD, FF, NUM_LAYERS = 2, 8, 32, 4, 64, 2

    root = jax.random.PRNGKey(0)
    k_src, k_pos, k_par = jax.random.split(root, 3)
    src = jax.random.normal(k_src, (B, S, D), jnp.float32)
    pos = jax.random.normal(k_pos, (B, S, D), jnp.float32)

    layer_params = [_make_layer_params(jax.random.fold_in(k_par, i), D, FF)
                    for i in range(NUM_LAYERS)]
    final_norm = {"g": jnp.ones((1, D), jnp.float32),
                  "b": jnp.zeros((1, D), jnp.float32)}

    out = transformer_encoder(src, pos, layer_params, final_norm, D, NHEAD)
    out = jax.block_until_ready(out)
    assert out.shape == (B, S, D)
    assert bool(jnp.isfinite(out).all())
    print("KERNEL_OK")
</pallas_src>

<mosaic_0001>
module attributes {stable_mosaic.version = 11 : i64} {
  func.func @encoder_layer_kernel(%arg0: i32, %arg1: i32, %arg2: memref<1x8x32xf32, #tpu.memory_space<vmem>>, %arg3: memref<1x8x32xf32, #tpu.memory_space<vmem>>, %arg4: memref<1x8x32xf32, #tpu.memory_space<vmem>>, %arg5: memref<1x8x32xf32, #tpu.memory_space<vmem>>, %arg6: memref<32x96xbf16, #tpu.memory_space<vmem>>, %arg7: memref<1x96xf32, #tpu.memory_space<vmem>>, %arg8: memref<32x32xbf16, #tpu.memory_space<vmem>>, %arg9: memref<1x32xf32, #tpu.memory_space<vmem>>, %arg10: memref<1x32xf32, #tpu.memory_space<vmem>>, %arg11: memref<1x32xf32, #tpu.memory_space<vmem>>, %arg12: memref<1x32xf32, #tpu.memory_space<vmem>>, %arg13: memref<1x32xf32, #tpu.memory_space<vmem>>, %arg14: memref<32x64xbf16, #tpu.memory_space<vmem>>, %arg15: memref<1x64xf32, #tpu.memory_space<vmem>>, %arg16: memref<64x32xbf16, #tpu.memory_space<vmem>>, %arg17: memref<1x32xf32, #tpu.memory_space<vmem>>, %arg18: memref<1x8x32xf32, #tpu.memory_space<vmem>>, %arg19: memref<8x32xf32, #tpu.memory_space<vmem>>) attributes {dimension_semantics = [#tpu.dimension_semantics<parallel>, #tpu.dimension_semantics<parallel>], iteration_bounds = array<i64: 2, 1>, scalar_prefetch = 0 : i64, scratch_operands = 1 : i64, tpu.core_type = #tpu.core_type<tc>, window_params = [{transform_indices = @transform_0, window_bounds = array<i64: 1, 8, 32>}, {transform_indices = @transform_1, window_bounds = array<i64: 1, 8, 32>}, {transform_indices = @transform_2, window_bounds = array<i64: 1, 8, 32>}, {transform_indices = @transform_3, window_bounds = array<i64: 1, 8, 32>}, {pipeline_mode = #tpu.pipeline_mode<synchronous>, transform_indices = @transform_4, window_bounds = array<i64: 32, 96>}, {pipeline_mode = #tpu.pipeline_mode<synchronous>, transform_indices = @transform_5, window_bounds = array<i64: 1, 96>}, {pipeline_mode = #tpu.pipeline_mode<synchronous>, transform_indices = @transform_6, window_bounds = array<i64: 32, 32>}, {pipeline_mode = #tpu.pipeline_mode<synchronous>, transform_indices = @transform_7, window_bounds = array<i64: 1, 32>}, {pipeline_mode = #tpu.pipeline_mode<synchronous>, transform_indices = @transform_8, window_bounds = array<i64: 1, 32>}, {pipeline_mode = #tpu.pipeline_mode<synchronous>, transform_indices = @transform_9, window_bounds = array<i64: 1, 32>}, {pipeline_mode = #tpu.pipeline_mode<synchronous>, transform_indices = @transform_10, window_bounds = array<i64: 1, 32>}, {pipeline_mode = #tpu.pipeline_mode<synchronous>, transform_indices = @transform_11, window_bounds = array<i64: 1, 32>}, {pipeline_mode = #tpu.pipeline_mode<synchronous>, transform_indices = @transform_12, window_bounds = array<i64: 32, 64>}, {pipeline_mode = #tpu.pipeline_mode<synchronous>, transform_indices = @transform_13, window_bounds = array<i64: 1, 64>}, {pipeline_mode = #tpu.pipeline_mode<synchronous>, transform_indices = @transform_14, window_bounds = array<i64: 64, 32>}, {pipeline_mode = #tpu.pipeline_mode<synchronous>, transform_indices = @transform_15, window_bounds = array<i64: 1, 32>}, {transform_indices = @transform_16, window_bounds = array<i64: 1, 8, 32>}]} {
    %c0 = arith.constant 0 : index
    %c0_0 = arith.constant 0 : index
    %c0_1 = arith.constant 0 : index
    %0 = vector.load %arg2[%c0, %c0_0, %c0_1] : memref<1x8x32xf32, #tpu.memory_space<vmem>>, vector<1x8x32xf32>
    %1 = vector.shape_cast %0 : vector<1x8x32xf32> to vector<8x32xf32>
    %c0_2 = arith.constant 0 : index
    %c0_3 = arith.constant 0 : index
    %c0_4 = arith.constant 0 : index
    %2 = vector.load %arg3[%c0_2, %c0_3, %c0_4] : memref<1x8x32xf32, #tpu.memory_space<vmem>>, vector<1x8x32xf32>
    %3 = vector.shape_cast %2 : vector<1x8x32xf32> to vector<8x32xf32>
    %c0_5 = arith.constant 0 : index
    %c0_6 = arith.constant 0 : index
    %c0_7 = arith.constant 0 : index
    %4 = vector.load %arg4[%c0_5, %c0_6, %c0_7] : memref<1x8x32xf32, #tpu.memory_space<vmem>>, vector<1x8x32xf32>
    %5 = vector.shape_cast %4 : vector<1x8x32xf32> to vector<8x32xf32>
    %6 = arith.addf %1, %5 : vector<8x32xf32>
    %7 = arith.truncf %6 : vector<8x32xf32> to vector<8x32xbf16>
    %c0_8 = arith.constant 0 : index
    %c0_9 = arith.constant 0 : index
    %c0_10 = arith.constant 0 : index
    %8 = vector.load %arg5[%c0_8, %c0_9, %c0_10] : memref<1x8x32xf32, #tpu.memory_space<vmem>>, vector<1x8x32xf32>
    %9 = vector.shape_cast %8 : vector<1x8x32xf32> to vector<8x32xf32>
    %10 = arith.addf %3, %9 : vector<8x32xf32>
    %11 = arith.truncf %10 : vector<8x32xf32> to vector<8x32xbf16>
    %12 = arith.truncf %3 : vector<8x32xf32> to vector<8x32xbf16>
    %c0_11 = arith.constant 0 : index
    %c0_12 = arith.constant 0 : index
    %13 = vector.load %arg6[%c0_11, %c0_12] : memref<32x96xbf16, #tpu.memory_space<vmem>>, vector<32x96xbf16>
    %c0_13 = arith.constant 0 : index
    %c0_14 = arith.constant 0 : index
    %14 = vector.load %arg7[%c0_13, %c0_14] : memref<1x96xf32, #tpu.memory_space<vmem>>, vector<1x96xf32>
    %15 = vector.extract_strided_slice %13 {offsets = [0, 0], sizes = [32, 32], strides = [1, 1]} : vector<32x96xbf16> to vector<32x32xbf16>
    %cst = arith.constant dense<0.000000e+00> : vector<8x32xf32>
    %16 = tpu.matmul %7, %15, %cst {dimension_numbers = #tpu.dot_dimension_numbers<[1], [0], [0], [1], [0, 0, 1, 1], [], []>} : vector<8x32xbf16>, vector<32x32xbf16>, vector<8x32xf32> -> vector<8x32xf32>
    %17 = vector.extract_strided_slice %14 {offsets = [0, 0], sizes = [1, 32], strides = [1, 1]} : vector<1x96xf32> to vector<1x32xf32>
    %18 = vector.broadcast %17 : vector<1x32xf32> to vector<8x32xf32>
    %19 = arith.addf %16, %18 : vector<8x32xf32>
    %20 = arith.truncf %19 : vector<8x32xf32> to vector<8x32xbf16>
    %21 = vector.extract_strided_slice %13 {offsets = [0, 32], sizes = [32, 32], strides = [1, 1]} : vector<32x96xbf16> to vector<32x32xbf16>
    %cst_15 = arith.constant dense<0.000000e+00> : vector<8x32xf32>
    %22 = tpu.matmul %11, %21, %cst_15 {dimension_numbers = #tpu.dot_dimension_numbers<[1], [0], [0], [1], [0, 0, 1, 1], [], []>} : vector<8x32xbf16>, vector<32x32xbf16>, vector<8x32xf32> -> vector<8x32xf32>
    %23 = vector.extract_strided_slice %14 {offsets = [0, 32], sizes = [1, 32], strides = [1, 1]} : vector<1x96xf32> to vector<1x32xf32>
    %24 = vector.broadcast %23 : vector<1x32xf32> to vector<8x32xf32>
    %25 = arith.addf %22, %24 : vector<8x32xf32>
    %26 = arith.truncf %25 : vector<8x32xf32> to vector<8x32xbf16>
    %27 = vector.extract_strided_slice %13 {offsets = [0, 64], sizes = [32, 32], strides = [1, 1]} : vector<32x96xbf16> to vector<32x32xbf16>
    %cst_16 = arith.constant dense<0.000000e+00> : vector<8x32xf32>
    %28 = tpu.matmul %12, %27, %cst_16 {dimension_numbers = #tpu.dot_dimension_numbers<[1], [0], [0], [1], [0, 0, 1, 1], [], []>} : vector<8x32xbf16>, vector<32x32xbf16>, vector<8x32xf32> -> vector<8x32xf32>
    %29 = vector.extract_strided_slice %14 {offsets = [0, 64], sizes = [1, 32], strides = [1, 1]} : vector<1x96xf32> to vector<1x32xf32>
    %30 = vector.broadcast %29 : vector<1x32xf32> to vector<8x32xf32>
    %31 = arith.addf %28, %30 : vector<8x32xf32>
    %32 = arith.truncf %31 : vector<8x32xf32> to vector<8x32xbf16>
    %33 = vector.extract_strided_slice %20 {offsets = [0, 0], sizes = [8, 8], strides = [1, 1]} : vector<8x32xbf16> to vector<8x8xbf16>
    %34 = vector.extract_strided_slice %26 {offsets = [0, 0], sizes = [8, 8], strides = [1, 1]} : vector<8x32xbf16> to vector<8x8xbf16>
    %cst_17 = arith.constant dense<0.000000e+00> : vector<8x8xf32>
    %35 = tpu.matmul %33, %34, %cst_17 {dimension_numbers = #tpu.dot_dimension_numbers<[1], [1], [0], [0], [0, 0, 1, 0], [], []>} : vector<8x8xbf16>, vector<8x8xbf16>, vector<8x8xf32> -> vector<8x8xf32>
    %cst_18 = arith.constant 0.353553385 : f32
    %36 = vector.broadcast %cst_18 : f32 to vector<8x8xf32>
    %37 = arith.mulf %35, %36 : vector<8x8xf32>
    %cst_19 = arith.constant dense<0xFF800000> : vector<8xf32>
    %38 = vector.multi_reduction <maximumf>, %37, %cst_19 [1] : vector<8x8xf32> to vector<8xf32>
    %39 = vector.shape_cast %38 : vector<8xf32> to vector<8x1xf32>
    %40 = vector.broadcast %39 : vector<8x1xf32> to vector<8x8xf32>
    %41 = arith.subf %37, %40 : vector<8x8xf32>
    %42 = math.exp %41 : vector<8x8xf32>
    %cst_20 = arith.constant dense<0.000000e+00> : vector<8xf32>
    %43 = vector.multi_reduction <add>, %42, %cst_20 [1] : vector<8x8xf32> to vector<8xf32>
    %44 = vector.shape_cast %43 : vector<8xf32> to vector<8x1xf32>
    %45 = tpu.reciprocal %44 {approx = true} : vector<8x1xf32> -> vector<8x1xf32>
    %46 = vector.broadcast %45 : vector<8x1xf32> to vector<8x8xf32>
    %47 = arith.mulf %42, %46 : vector<8x8xf32>
    %48 = arith.truncf %47 : vector<8x8xf32> to vector<8x8xbf16>
    %49 = vector.extract_strided_slice %32 {offsets = [0, 0], sizes = [8, 8], strides = [1, 1]} : vector<8x32xbf16> to vector<8x8xbf16>
    %cst_21 = arith.constant dense<0.000000e+00> : vector<8x8xf32>
    %50 = tpu.matmul %48, %49, %cst_21 {dimension_numbers = #tpu.dot_dimension_numbers<[1], [0], [0], [1], [0, 0, 1, 1], [], []>} : vector<8x8xbf16>, vector<8x8xbf16>, vector<8x8xf32> -> vector<8x8xf32>
    %c0_22 = arith.constant 0 : index
    %c0_23 = arith.constant 0 : index
    %51 = vector.load %arg19[%c0_22, %c0_23] : memref<8x32xf32, #tpu.memory_space<vmem>>, vector<8x8xf32>
    tpu.vector_store %arg19[%c0_22, %c0_23], %50 {strides = array<i32>} : memref<8x32xf32, #tpu.memory_space<vmem>>, vector<8x8xf32>,
    %52 = vector.extract_strided_slice %20 {offsets = [0, 8], sizes = [8, 8], strides = [1, 1]} : vector<8x32xbf16> to vector<8x8xbf16>
    %53 = vector.extract_strided_slice %26 {offsets = [0, 8], sizes = [8, 8], strides = [1, 1]} : vector<8x32xbf16> to vector<8x8xbf16>
    %cst_24 = arith.constant dense<0.000000e+00> : vector<8x8xf32>
    %54 = tpu.matmul %52, %53, %cst_24 {dimension_numbers = #tpu.dot_dimension_numbers<[1], [1], [0], [0], [0, 0, 1, 0], [], []>} : vector<8x8xbf16>, vector<8x8xbf16>, vector<8x8xf32> -> vector<8x8xf32>
    %cst_25 = arith.constant 0.353553385 : f32
    %55 = vector.broadcast %cst_25 : f32 to vector<8x8xf32>
    %56 = arith.mulf %54, %55 : vector<8x8xf32>
    %cst_26 = arith.constant dense<0xFF800000> : vector<8xf32>
    %57 = vector.multi_reduction <maximumf>, %56, %cst_26 [1] : vector<8x8xf32> to vector<8xf32>
    %58 = vector.shape_cast %57 : vector<8xf32> to vector<8x1xf32>
    %59 = vector.broadcast %58 : vector<8x1xf32> to vector<8x8xf32>
    %60 = arith.subf %56, %59 : vector<8x8xf32>
    %61 = math.exp %60 : vector<8x8xf32>
    %cst_27 = arith.constant dense<0.000000e+00> : vector<8xf32>
    %62 = vector.multi_reduction <add>, %61, %cst_27 [1] : vector<8x8xf32> to vector<8xf32>
    %63 = vector.shape_cast %62 : vector<8xf32> to vector<8x1xf32>
    %64 = tpu.reciprocal %63 {approx = true} : vector<8x1xf32> -> vector<8x1xf32>
    %65 = vector.broadcast %64 : vector<8x1xf32> to vector<8x8xf32>
    %66 = arith.mulf %61, %65 : vector<8x8xf32>
    %67 = arith.truncf %66 : vector<8x8xf32> to vector<8x8xbf16>
    %68 = vector.extract_strided_slice %32 {offsets = [0, 8], sizes = [8, 8], strides = [1, 1]} : vector<8x32xbf16> to vector<8x8xbf16>
    %cst_28 = arith.constant dense<0.000000e+00> : vector<8x8xf32>
    %69 = tpu.matmul %67, %68, %cst_28 {dimension_numbers = #tpu.dot_dimension_numbers<[1], [0], [0], [1], [0, 0, 1, 1], [], []>} : vector<8x8xbf16>, vector<8x8xbf16>, vector<8x8xf32> -> vector<8x8xf32>
    %c0_29 = arith.constant 0 : index
    %c8 = arith.constant 8 : index
    %70 = vector.load %arg19[%c0_29, %c8] : memref<8x32xf32, #tpu.memory_space<vmem>>, vector<8x8xf32>
    tpu.vector_store %arg19[%c0_29, %c8], %69 {strides = array<i32>} : memref<8x32xf32, #tpu.memory_space<vmem>>, vector<8x8xf32>,
    %71 = vector.extract_strided_slice %20 {offsets = [0, 16], sizes = [8, 8], strides = [1, 1]} : vector<8x32xbf16> to vector<8x8xbf16>
    %72 = vector.extract_strided_slice %26 {offsets = [0, 16], sizes = [8, 8], strides = [1, 1]} : vector<8x32xbf16> to vector<8x8xbf16>
    %cst_30 = arith.constant dense<0.000000e+00> : vector<8x8xf32>
    %73 = tpu.matmul %71, %72, %cst_30 {dimension_numbers = #tpu.dot_dimension_numbers<[1], [1], [0], [0], [0, 0, 1, 0], [], []>} : vector<8x8xbf16>, vector<8x8xbf16>, vector<8x8xf32> -> vector<8x8xf32>
    %cst_31 = arith.constant 0.353553385 : f32
    %74 = vector.broadcast %cst_31 : f32 to vector<8x8xf32>
    %75 = arith.mulf %73, %74 : vector<8x8xf32>
    %cst_32 = arith.constant dense<0xFF800000> : vector<8xf32>
    %76 = vector.multi_reduction <maximumf>, %75, %cst_32 [1] : vector<8x8xf32> to vector<8xf32>
    %77 = vector.shape_cast %76 : vector<8xf32> to vector<8x1xf32>
    %78 = vector.broadcast %77 : vector<8x1xf32> to vector<8x8xf32>
    %79 = arith.subf %75, %78 : vector<8x8xf32>
    %80 = math.exp %79 : vector<8x8xf32>
    %cst_33 = arith.constant dense<0.000000e+00> : vector<8xf32>
    %81 = vector.multi_reduction <add>, %80, %cst_33 [1] : vector<8x8xf32> to vector<8xf32>
    %82 = vector.shape_cast %81 : vector<8xf32> to vector<8x1xf32>
    %83 = tpu.reciprocal %82 {approx = true} : vector<8x1xf32> -> vector<8x1xf32>
    %84 = vector.broadcast %83 : vector<8x1xf32> to vector<8x8xf32>
    %85 = arith.mulf %80, %84 : vector<8x8xf32>
    %86 = arith.truncf %85 : vector<8x8xf32> to vector<8x8xbf16>
    %87 = vector.extract_strided_slice %32 {offsets = [0, 16], sizes = [8, 8], strides = [1, 1]} : vector<8x32xbf16> to vector<8x8xbf16>
    %cst_34 = arith.constant dense<0.000000e+00> : vector<8x8xf32>
    %88 = tpu.matmul %86, %87, %cst_34 {dimension_numbers = #tpu.dot_dimension_numbers<[1], [0], [0], [1], [0, 0, 1, 1], [], []>} : vector<8x8xbf16>, vector<8x8xbf16>, vector<8x8xf32> -> vector<8x8xf32>
    %c0_35 = arith.constant 0 : index
    %c16 = arith.constant 16 : index
    %89 = vector.load %arg19[%c0_35, %c16] : memref<8x32xf32, #tpu.memory_space<vmem>>, vector<8x8xf32>
    tpu.vector_store %arg19[%c0_35, %c16], %88 {strides = array<i32>} : memref<8x32xf32, #tpu.memory_space<vmem>>, vector<8x8xf32>,
    %90 = vector.extract_strided_slice %20 {offsets = [0, 24], sizes = [8, 8], strides = [1, 1]} : vector<8x32xbf16> to vector<8x8xbf16>
    %91 = vector.extract_strided_slice %26 {offsets = [0, 24], sizes = [8, 8], strides = [1, 1]} : vector<8x32xbf16> to vector<8x8xbf16>
    %cst_36 = arith.constant dense<0.000000e+00> : vector<8x8xf32>
    %92 = tpu.matmul %90, %91, %cst_36 {dimension_numbers = #tpu.dot_dimension_numbers<[1], [1], [0], [0], [0, 0, 1, 0], [], []>} : vector<8x8xbf16>, vector<8x8xbf16>, vector<8x8xf32> -> vector<8x8xf32>
    %cst_37 = arith.constant 0.353553385 : f32
    %93 = vector.broadcast %cst_37 : f32 to vector<8x8xf32>
    %94 = arith.mulf %92, %93 : vector<8x8xf32>
    %cst_38 = arith.constant dense<0xFF800000> : vector<8xf32>
    %95 = vector.multi_reduction <maximumf>, %94, %cst_38 [1] : vector<8x8xf32> to vector<8xf32>
    %96 = vector.shape_cast %95 : vector<8xf32> to vector<8x1xf32>
    %97 = vector.broadcast %96 : vector<8x1xf32> to vector<8x8xf32>
    %98 = arith.subf %94, %97 : vector<8x8xf32>
    %99 = math.exp %98 : vector<8x8xf32>
    %cst_39 = arith.constant dense<0.000000e+00> : vector<8xf32>
    %100 = vector.multi_reduction <add>, %99, %cst_39 [1] : vector<8x8xf32> to vector<8xf32>
    %101 = vector.shape_cast %100 : vector<8xf32> to vector<8x1xf32>
    %102 = tpu.reciprocal %101 {approx = true} : vector<8x1xf32> -> vector<8x1xf32>
    %103 = vector.broadcast %102 : vector<8x1xf32> to vector<8x8xf32>
    %104 = arith.mulf %99, %103 : vector<8x8xf32>
    %105 = arith.truncf %104 : vector<8x8xf32> to vector<8x8xbf16>
    %106 = vector.extract_strided_slice %32 {offsets = [0, 24], sizes = [8, 8], strides = [1, 1]} : vector<8x32xbf16> to vector<8x8xbf16>
    %cst_40 = arith.constant dense<0.000000e+00> : vector<8x8xf32>
    %107 = tpu.matmul %105, %106, %cst_40 {dimension_numbers = #tpu.dot_dimension_numbers<[1], [0], [0], [1], [0, 0, 1, 1], [], []>} : vector<8x8xbf16>, vector<8x8xbf16>, vector<8x8xf32> -> vector<8x8xf32>
    %c0_41 = arith.constant 0 : index
    %c24 = arith.constant 24 : index
    %108 = vector.load %arg19[%c0_41, %c24] : memref<8x32xf32, #tpu.memory_space<vmem>>, vector<8x8xf32>
    tpu.vector_store %arg19[%c0_41, %c24], %107 {strides = array<i32>} : memref<8x32xf32, #tpu.memory_space<vmem>>, vector<8x8xf32>,
    %c0_42 = arith.constant 0 : index
    %c0_43 = arith.constant 0 : index
    %109 = vector.load %arg19[%c0_42, %c0_43] : memref<8x32xf32, #tpu.memory_space<vmem>>, vector<8x32xf32>
    %110 = arith.truncf %109 : vector<8x32xf32> to vector<8x32xbf16>
    %c0_44 = arith.constant 0 : index
    %c0_45 = arith.constant 0 : index
    %111 = vector.load %arg8[%c0_44, %c0_45] : memref<32x32xbf16, #tpu.memory_space<vmem>>, vector<32x32xbf16>
    %cst_46 = arith.constant dense<0.000000e+00> : vector<8x32xf32>
    %112 = tpu.matmul %110, %111, %cst_46 {dimension_numbers = #tpu.dot_dimension_numbers<[1], [0], [0], [1], [0, 0, 1, 1], [], []>} : vector<8x32xbf16>, vector<32x32xbf16>, vector<8x32xf32> -> vector<8x32xf32>
    %c0_47 = arith.constant 0 : index
    %c0_48 = arith.constant 0 : index
    %113 = vector.load %arg9[%c0_47, %c0_48] : memref<1x32xf32, #tpu.memory_space<vmem>>, vector<1x32xf32>
    %114 = vector.broadcast %113 : vector<1x32xf32> to vector<8x32xf32>
    %115 = arith.addf %112, %114 : vector<8x32xf32>
    %116 = arith.addf %1, %115 : vector<8x32xf32>
    %c0_49 = arith.constant 0 : index
    %c0_50 = arith.constant 0 : index
    %117 = vector.load %arg10[%c0_49, %c0_50] : memref<1x32xf32, #tpu.memory_space<vmem>>, vector<1x32xf32>
    %c0_51 = arith.constant 0 : index
    %c0_52 = arith.constant 0 : index
    %118 = vector.load %arg11[%c0_51, %c0_52] : memref<1x32xf32, #tpu.memory_space<vmem>>, vector<1x32xf32>
    %cst_53 = arith.constant dense<0.000000e+00> : vector<8xf32>
    %119 = vector.multi_reduction <add>, %116, %cst_53 [1] : vector<8x32xf32> to vector<8xf32>
    %120 = vector.shape_cast %119 : vector<8xf32> to vector<8x1xf32>
    %cst_54 = arith.constant 3.200000e+01 : f32
    %121 = vector.broadcast %cst_54 : f32 to vector<8x1xf32>
    %122 = arith.divf %120, %121 : vector<8x1xf32>
    %123 = vector.broadcast %122 : vector<8x1xf32> to vector<8x32xf32>
    %124 = arith.subf %116, %123 : vector<8x32xf32>
    %125 = arith.mulf %124, %124 : vector<8x32xf32>
    %cst_55 = arith.constant dense<0.000000e+00> : vector<8xf32>
    %126 = vector.multi_reduction <add>, %125, %cst_55 [1] : vector<8x32xf32> to vector<8xf32>
    %127 = vector.shape_cast %126 : vector<8xf32> to vector<8x1xf32>
    %cst_56 = arith.constant 3.200000e+01 : f32
    %128 = vector.broadcast %cst_56 : f32 to vector<8x1xf32>
    %129 = arith.divf %127, %128 : vector<8x1xf32>
    %130 = vector.broadcast %122 : vector<8x1xf32> to vector<8x32xf32>
    %131 = arith.subf %116, %130 : vector<8x32xf32>
    %cst_57 = arith.constant 9.99999974E-6 : f32
    %132 = vector.broadcast %cst_57 : f32 to vector<8x1xf32>
    %133 = arith.addf %129, %132 : vector<8x1xf32>
    %134 = math.rsqrt %133 : vector<8x1xf32>
    %135 = vector.broadcast %134 : vector<8x1xf32> to vector<8x32xf32>
    %136 = arith.mulf %131, %135 : vector<8x32xf32>
    %137 = vector.broadcast %117 : vector<1x32xf32> to vector<8x32xf32>
    %138 = arith.mulf %136, %137 : vector<8x32xf32>
    %139 = vector.broadcast %118 : vector<1x32xf32> to vector<8x32xf32>
    %140 = arith.addf %138, %139 : vector<8x32xf32>
    %141 = arith.truncf %140 : vector<8x32xf32> to vector<8x32xbf16>
    %cst_58 = arith.constant 0.000000e+00 : f32
    %142 = vector.broadcast %cst_58 : f32 to vector<8x32xf32>
    %c0_59 = arith.constant 0 : index
    %c0_60 = arith.constant 0 : index
    %143 = vector.load %arg14[%c0_59, %c0_60] : memref<32x64xbf16, #tpu.memory_space<vmem>>, vector<32x64xbf16>
    %cst_61 = arith.constant dense<0.000000e+00> : vector<8x64xf32>
    %144 = tpu.matmul %141, %143, %cst_61 {dimension_numbers = #tpu.dot_dimension_numbers<[1], [0], [0], [1], [0, 0, 1, 1], [], []>} : vector<8x32xbf16>, vector<32x64xbf16>, vector<8x64xf32> -> vector<8x64xf32>
    %c0_62 = arith.constant 0 : index
    %c0_63 = arith.constant 0 : index
    %145 = vector.load %arg15[%c0_62, %c0_63] : memref<1x64xf32, #tpu.memory_space<vmem>>, vector<1x64xf32>
    %146 = vector.broadcast %145 : vector<1x64xf32> to vector<8x64xf32>
    %147 = arith.addf %144, %146 : vector<8x64xf32>
    %cst_64 = arith.constant 0.000000e+00 : f32
    %148 = vector.broadcast %cst_64 : f32 to vector<8x64xf32>
    %149 = arith.maximumf %147, %148 : vector<8x64xf32>
    %150 = arith.truncf %149 : vector<8x64xf32> to vector<8x64xbf16>
    %c0_65 = arith.constant 0 : index
    %c0_66 = arith.constant 0 : index
    %151 = vector.load %arg16[%c0_65, %c0_66] : memref<64x32xbf16, #tpu.memory_space<vmem>>, vector<64x32xbf16>
    %cst_67 = arith.constant dense<0.000000e+00> : vector<8x32xf32>
    %152 = tpu.matmul %150, %151, %cst_67 {dimension_numbers = #tpu.dot_dimension_numbers<[1], [0], [0], [1], [0, 0, 1, 1], [], []>} : vector<8x64xbf16>, vector<64x32xbf16>, vector<8x32xf32> -> vector<8x32xf32>
    %153 = arith.addf %142, %152 : vector<8x32xf32>
    %c0_68 = arith.constant 0 : index
    %c0_69 = arith.constant 0 : index
    %154 = vector.load %arg17[%c0_68, %c0_69] : memref<1x32xf32, #tpu.memory_space<vmem>>, vector<1x32xf32>
    %155 = vector.broadcast %154 : vector<1x32xf32> to vector<8x32xf32>
    %156 = arith.addf %153, %155 : vector<8x32xf32>
    %157 = arith.addf %140, %156 : vector<8x32xf32>
    %c0_70 = arith.constant 0 : index
    %c0_71 = arith.constant 0 : index
    %158 = vector.load %arg12[%c0_70, %c0_71] : memref<1x32xf32, #tpu.memory_space<vmem>>, vector<1x32xf32>
    %c0_72 = arith.constant 0 : index
    %c0_73 = arith.constant 0 : index
    %159 = vector.load %arg13[%c0_72, %c0_73] : memref<1x32xf32, #tpu.memory_space<vmem>>, vector<1x32xf32>
    %cst_74 = arith.constant dense<0.000000e+00> : vector<8xf32>
    %160 = vector.multi_reduction <add>, %157, %cst_74 [1] : vector<8x32xf32> to vector<8xf32>
    %161 = vector.shape_cast %160 : vector<8xf32> to vector<8x1xf32>
    %cst_75 = arith.constant 3.200000e+01 : f32
    %162 = vector.broadcast %cst_75 : f32 to vector<8x1xf32>
    %163 = arith.divf %161, %162 : vector<8x1xf32>
    %164 = vector.broadcast %163 : vector<8x1xf32> to vector<8x32xf32>
    %165 = arith.subf %157, %164 : vector<8x32xf32>
    %166 = arith.mulf %165, %165 : vector<8x32xf32>
    %cst_76 = arith.constant dense<0.000000e+00> : vector<8xf32>
    %167 = vector.multi_reduction <add>, %166, %cst_76 [1] : vector<8x32xf32> to vector<8xf32>
    %168 = vector.shape_cast %167 : vector<8xf32> to vector<8x1xf32>
    %cst_77 = arith.constant 3.200000e+01 : f32
    %169 = vector.broadcast %cst_77 : f32 to vector<8x1xf32>
    %170 = arith.divf %168, %169 : vector<8x1xf32>
    %171 = vector.broadcast %163 : vector<8x1xf32> to vector<8x32xf32>
    %172 = arith.subf %157, %171 : vector<8x32xf32>
    %cst_78 = arith.constant 9.99999974E-6 : f32
    %173 = vector.broadcast %cst_78 : f32 to vector<8x1xf32>
    %174 = arith.addf %170, %173 : vector<8x1xf32>
    %175 = math.rsqrt %174 : vector<8x1xf32>
    %176 = vector.broadcast %175 : vector<8x1xf32> to vector<8x32xf32>
    %177 = arith.mulf %172, %176 : vector<8x32xf32>
    %178 = vector.broadcast %158 : vector<1x32xf32> to vector<8x32xf32>
    %179 = arith.mulf %177, %178 : vector<8x32xf32>
    %180 = vector.broadcast %159 : vector<1x32xf32> to vector<8x32xf32>
    %181 = arith.addf %179, %180 : vector<8x32xf32>
    %c0_79 = arith.constant 0 : index
    %c0_80 = arith.constant 0 : index
    %c0_81 = arith.constant 0 : index
    %182 = vector.load %arg18[%c0_79, %c0_80, %c0_81] : memref<1x8x32xf32, #tpu.memory_space<vmem>>, vector<1x8x32xf32>
    %183 = vector.shape_cast %182 : vector<1x8x32xf32> to vector<8x32xf32>
    %184 = vector.shape_cast %181 : vector<8x32xf32> to vector<1x8x32xf32>
    tpu.vector_store %arg18[%c0_79, %c0_80, %c0_81], %184 {strides = array<i32>} : memref<1x8x32xf32, #tpu.memory_space<vmem>>, vector<1x8x32xf32>,
    return
  }
  func.func @transform_0(%arg0: i32, %arg1: i32) -> (i32, i32, i32) {
    %c0_i32 = arith.constant 0 : i32
    %c0_i32_0 = arith.constant 0 : i32
    return %arg0, %arg1, %c0_i32 : i32, i32, i32
  }
  func.func @transform_1(%arg0: i32, %arg1: i32) -> (i32, i32, i32) {
    %c0_i32 = arith.constant 0 : i32
    %c0_i32_0 = arith.constant 0 : i32
    %c0_i32_1 = arith.constant 0 : i32
    return %arg0, %c0_i32, %c0_i32_0 : i32, i32, i32
  }
  func.func @transform_2(%arg0: i32, %arg1: i32) -> (i32, i32, i32) {
    %c0_i32 = arith.constant 0 : i32
    %c0_i32_0 = arith.constant 0 : i32
    return %arg0, %arg1, %c0_i32 : i32, i32, i32
  }
  func.func @transform_3(%arg0: i32, %arg1: i32) -> (i32, i32, i32) {
    %c0_i32 = arith.constant 0 : i32
    %c0_i32_0 = arith.constant 0 : i32
    %c0_i32_1 = arith.constant 0 : i32
    return %arg0, %c0_i32, %c0_i32_0 : i32, i32, i32
  }
  func.func @transform_4(%arg0: i32, %arg1: i32) -> (i32, i32) {
    %c0_i32 = arith.constant 0 : i32
    %c0_i32_0 = arith.constant 0 : i32
    %c0_i32_1 = arith.constant 0 : i32
    return %c0_i32, %c0_i32_0 : i32, i32
  }
  func.func @transform_5(%arg0: i32, %arg1: i32) -> (i32, i32) {
    %c0_i32 = arith.constant 0 : i32
    %c0_i32_0 = arith.constant 0 : i32
    %c0_i32_1 = arith.constant 0 : i32
    return %c0_i32, %c0_i32_0 : i32, i32
  }
  func.func @transform_6(%arg0: i32, %arg1: i32) -> (i32, i32) {
    %c0_i32 = arith.constant 0 : i32
    %c0_i32_0 = arith.constant 0 : i32
    %c0_i32_1 = arith.constant 0 : i32
    return %c0_i32, %c0_i32_0 : i32, i32
  }
  func.func @transform_7(%arg0: i32, %arg1: i32) -> (i32, i32) {
    %c0_i32 = arith.constant 0 : i32
    %c0_i32_0 = arith.constant 0 : i32
    %c0_i32_1 = arith.constant 0 : i32
    return %c0_i32, %c0_i32_0 : i32, i32
  }
  func.func @transform_8(%arg0: i32, %arg1: i32) -> (i32, i32) {
    %c0_i32 = arith.constant 0 : i32
    %c0_i32_0 = arith.constant 0 : i32
    %c0_i32_1 = arith.constant 0 : i32
    return %c0_i32, %c0_i32_0 : i32, i32
  }
  func.func @transform_9(%arg0: i32, %arg1: i32) -> (i32, i32) {
    %c0_i32 = arith.constant 0 : i32
    %c0_i32_0 = arith.constant 0 : i32
    %c0_i32_1 = arith.constant 0 : i32
    return %c0_i32, %c0_i32_0 : i32, i32
  }
  func.func @transform_10(%arg0: i32, %arg1: i32) -> (i32, i32) {
    %c0_i32 = arith.constant 0 : i32
    %c0_i32_0 = arith.constant 0 : i32
    %c0_i32_1 = arith.constant 0 : i32
    return %c0_i32, %c0_i32_0 : i32, i32
  }
  func.func @transform_11(%arg0: i32, %arg1: i32) -> (i32, i32) {
    %c0_i32 = arith.constant 0 : i32
    %c0_i32_0 = arith.constant 0 : i32
    %c0_i32_1 = arith.constant 0 : i32
    return %c0_i32, %c0_i32_0 : i32, i32
  }
  func.func @transform_12(%arg0: i32, %arg1: i32) -> (i32, i32) {
    %c0_i32 = arith.constant 0 : i32
    %c0_i32_0 = arith.constant 0 : i32
    %c0_i32_1 = arith.constant 0 : i32
    return %c0_i32, %c0_i32_0 : i32, i32
  }
  func.func @transform_13(%arg0: i32, %arg1: i32) -> (i32, i32) {
    %c0_i32 = arith.constant 0 : i32
    %c0_i32_0 = arith.constant 0 : i32
    %c0_i32_1 = arith.constant 0 : i32
    return %c0_i32, %c0_i32_0 : i32, i32
  }
  func.func @transform_14(%arg0: i32, %arg1: i32) -> (i32, i32) {
    %c0_i32 = arith.constant 0 : i32
    %c0_i32_0 = arith.constant 0 : i32
    %c0_i32_1 = arith.constant 0 : i32
    return %c0_i32, %c0_i32_0 : i32, i32
  }
  func.func @transform_15(%arg0: i32, %arg1: i32) -> (i32, i32) {
    %c0_i32 = arith.constant 0 : i32
    %c0_i32_0 = arith.constant 0 : i32
    %c0_i32_1 = arith.constant 0 : i32
    return %c0_i32, %c0_i32_0 : i32, i32
  }
  func.func @transform_16(%arg0: i32, %arg1: i32) -> (i32, i32, i32) {
    %c0_i32 = arith.constant 0 : i32
    %c0_i32_0 = arith.constant 0 : i32
    return %arg0, %arg1, %c0_i32 : i32, i32, i32
  }
}

</mosaic_0001>

<llo_original>
// kernel: tpu_custom_call.1
$region0: #{tpu_custom_call.1}
  #allocation0 [shape = 'u32[]', space=smem, size = 0x4, offset = 0x4, fixed_abs, tag = 'smem constant byte address 0x4 - core index']
  #allocation1 [shape = 'u32[72,128]{1,0:T(1,128)}', space=vmem, size = 0x9000, scoped, tag = 'internal scratch']
  #allocation2 [shape = 'f32[8,32]{1,0:T(8,128)}', space=vmem, size = 0x1000, scoped, tag = 'scratch operand']
  %s0 = inlined_call_operand.vmem [shape: f32[2,8,32], index: 0, kind: input, shape index: {}]
  %s1 = inlined_call_operand.vmem [shape: f32[2,8,32], index: 1, kind: input, shape index: {}]
  %s2 = inlined_call_operand.vmem [shape: f32[2,8,32], index: 2, kind: input, shape index: {}]
  %s3 = inlined_call_operand.hbm [shape: f32[2,8,32], index: 3, kind: input, shape index: {}]
  %s4 = inlined_call_operand.hbm [shape: bf16[32,96], index: 4, kind: input, shape index: {}]
  %s5 = inlined_call_operand.vmem [shape: f32[1,96], index: 5, kind: input, shape index: {}]
  %s6 = inlined_call_operand.hbm [shape: bf16[32,32], index: 6, kind: input, shape index: {}]
  %s7 = inlined_call_operand.vmem [shape: f32[1,32], index: 7, kind: input, shape index: {}]
  %s8 = inlined_call_operand.vmem [shape: f32[1,32], index: 8, kind: input, shape index: {}]
  %s9 = inlined_call_operand.vmem [shape: f32[1,32], index: 9, kind: input, shape index: {}]
  %s10 = inlined_call_operand.vmem [shape: f32[1,32], index: 10, kind: input, shape index: {}]
  %s11 = inlined_call_operand.vmem [shape: f32[1,32], index: 11, kind: input, shape index: {}]
  %s12 = inlined_call_operand.hbm [shape: bf16[32,64], index: 12, kind: input, shape index: {}]
  %s13 = inlined_call_operand.vmem [shape: f32[1,64], index: 13, kind: input, shape index: {}]
  %s14 = inlined_call_operand.vmem [shape: bf16[64,32], index: 14, kind: input, shape index: {}]
  %s15 = inlined_call_operand.vmem [shape: f32[1,32], index: 15, kind: input, shape index: {}]
  %s16 = inlined_call_operand.hbm [shape: f32[2,8,32], index: 16, kind: output, shape index: {}]
  %s17 = sld [smem:[#allocation0]]
  $region113: #{tpu_custom_call.1} parent=0
    _
  %s19 = ssub.s32 1, %s17
  %s20 = scalar_select 0, %s19, %s17
  $region1: #{tpu_custom_call.1} parent=0
    #allocation3 [shape = 'u8[8192]{0}', space=vmem, size = 0x2000, scoped, tag = 'input window, operand 3']
    #allocation4 [shape = 's32[2]{0}', space=sflag, size = 0x8, scoped, tag = 'scoped memory for tpu_custom_call.1']
    #allocation5 [shape = 's32[2]{0}', space=sflag, size = 0x8, scoped, tag = 'scoped memory for tpu_custom_call.1']
    #allocation6 [shape = 'u8[8192]{0}', space=vmem, size = 0x2000, scoped, tag = 'input window, operand 4, single buffered']
    #allocation7 [shape = 's32[1]{0}', space=sflag, size = 0x4, scoped, tag = 'scoped memory for tpu_custom_call.1']
    #allocation8 [shape = 'u8[8192]{0}', space=vmem, size = 0x2000, scoped, tag = 'input window, operand 6, single buffered']
    #allocation9 [shape = 'u8[8192]{0}', space=vmem, size = 0x2000, scoped, tag = 'input window, operand 12, single buffered']
    #allocation10 [shape = 's32[1]{0}', space=sflag, size = 0x4, scoped, tag = 'scoped memory for tpu_custom_call.1']
    #allocation11 [shape = 'u8[8192]{0}', space=vmem, size = 0x2000, scoped, tag = 'output window, operand 0']
    %21 = vsyncpa [#allocation4], 0
    %s22 = scalar_lea.sflag [#allocation4], 1
    %23 = vsyncpa %s22, 0
    %24 = vsyncpa [#allocation7], 0
    %25 = vsyncpa [#allocation10], 0
    %26 = vsyncpa [#allocation5], 0
    %s27 = scalar_lea.sflag [#allocation5], 1
    %28 = vsyncpa %s27, 0
    loop: start=0, step=1, limit=4
    $region2: #{tpu_custom_call.1} parent=1 // loop_pre_header
      _
    $region3: #{tpu_custom_call.1} parent=1 // loop_header
      %s30 = sphi 0, %s34
      %p31 = scmp.ge.s32.totalorder %s30, 4
      %s37 = sphi 0, %s49
      %s38 = sphi 0, %s45
      %s39 = sphi 0, %s37
      %s40 = sphi 0, %s38
      %s41 = sphi 0, %s39
      %s42 = sphi 0, %s40
      %s54 = sphi 0, %s56
      %s57 = sphi 0, %s54
      %s58 = sphi 0, %s57
      %s74 = sphi 0, %s58
      %s80 = sphi 0, %s82
      %s83 = sphi 0, %s80
      %s84 = sphi 0, %s83
      %s100 = sphi 0, %s84
      %s108 = sphi 0, %s110
      %s111 = sphi 0, %s108
      %s112 = sphi 0, %s111
      %s128 = sphi 0, %s112
      %s134 = sphi 0, %s136
      %s137 = sphi 0, %s134
      %s138 = sphi 0, %s137
      %s154 = sphi 0, %s138
      %s158 = sphi 0, %s158
      %s160 = sphi 0, %s158
      %s161 = sphi 0, %s160
      %s175 = sphi 0, %s161
      %s179 = sphi 0, %s179
      %s181 = sphi 0, %s179
      %s182 = sphi 0, %s181
      %s196 = sphi 0, %s182
      %s200 = sphi 0, %s200
      %s202 = sphi 0, %s200
      %s203 = sphi 0, %s202
      %s217 = sphi 0, %s203
      %s221 = sphi 0, %s221
      %s223 = sphi 0, %s221
      %s224 = sphi 0, %s223
      %s238 = sphi 0, %s224
      %s242 = sphi 0, %s242
      %s244 = sphi 0, %s242
      %s245 = sphi 0, %s244
      %s259 = sphi 0, %s245
      %s263 = sphi 0, %s263
      %s265 = sphi 0, %s263
      %s266 = sphi 0, %s265
      %s280 = sphi 0, %s266
      %s284 = sphi 0, %s284
      %s286 = sphi 0, %s284
      %s287 = sphi 0, %s286
      %s301 = sphi 0, %s287
      %s305 = sphi 0, %s305
      %s307 = sphi 0, %s305
      %s308 = sphi 0, %s307
      %s322 = sphi 0, %s308
      %s326 = sphi 0, %s326
      %s328 = sphi 0, %s326
      %s329 = sphi 0, %s328
      %s343 = sphi 0, %s329
      %s347 = sphi 0, %s347
      %s349 = sphi 0, %s347
      %s350 = sphi 0, %s349
      %s364 = sphi 0, %s350
      %s368 = sphi 0, %s368
      %s370 = sphi 0, %s368
      %s371 = sphi 0, %s370
      %s385 = sphi 0, %s371
      %s389 = sphi 0, %s389
      %s391 = sphi 0, %s389
      %s392 = sphi 0, %s391
      %s406 = sphi 0, %s392
      %s414 = sphi 0, %s416
      %s417 = sphi 0, %s414
      %s418 = sphi 0, %s417
      %s434 = sphi 0, %s418
    $region4: #{tpu_custom_call.1} parent=1 // loop_header_branch
      %33 = sbr.rel (%p31) target = $region8
    $region5: #{tpu_custom_call.1} parent=1 // loop_body
      %s35 = ssub.s32 %s30, 1
      %s36 = ssub.s32 %s30, 2
      %s43 = sadd.s32 1, %s38
      %p44 = scmp.ge.s32.totalorder %s43, 1
      %s45 = scalar_select %p44, 0, %s43
      %s46 = sadd.s32 1, %s37
      %s47 = scalar_select %p44, %s46, %s37
      %p48 = scmp.ge.s32.totalorder %s47, 2
      %s49 = scalar_select %p48, 0, %s47
      %s50 = ssub.s32 %s37, %s49
      %s51 = ssub.s32 %s38, %s45
      %s52 = sor.u32 %s50, %s51
      %p53 = scmp.eq.s32.totalorder %s52, 0
      %s55 = sadd.s32 %s54, 1
      %s56 = scalar_select %p53, %s54, %s55
      %p59 = pneg %p53
      %p60 = scmp.eq.s32.totalorder %s30, 1
      %p61 = por %p59, %p60
      %p62 = scmp.ne.s32.totalorder %s54, %s57
      %p63 = scmp.eq.s32.totalorder %s30, 0
      %p64 = por %p62, %p63
      %p65 = scmp.ne.s32.totalorder %s54, %s57
      %p66 = scmp.eq.s32.totalorder %s35, 1
      %p67 = por %p65, %p66
      %p68 = scmp.ne.s32.totalorder %s57, %s58
      %p69 = scmp.eq.s32.totalorder %s35, 0
      %p70 = por %p68, %p69
      %p71 = scmp.ne.s32.totalorder %s57, %s58
      %p72 = scmp.eq.s32.totalorder %s36, 1
      %p73 = por %p71, %p72
      %p75 = scmp.ne.s32.totalorder %s58, %s74
      %p76 = scmp.eq.s32.totalorder %s36, 0
      %p77 = por %p75, %p76
      %s78 = ssub.s32 %s37, %s49
      %p79 = scmp.eq.s32.totalorder %s78, 0
      %s81 = sadd.s32 %s80, 1
      %s82 = scalar_select %p79, %s80, %s81
      %p85 = pneg %p79
      %p86 = scmp.eq.s32.totalorder %s30, 1
      %p87 = por %p85, %p86
      %p88 = scmp.ne.s32.totalorder %s80, %s83
      %p89 = scmp.eq.s32.totalorder %s30, 0
      %p90 = por %p88, %p89
      %p91 = scmp.ne.s32.totalorder %s80, %s83
      %p92 = scmp.eq.s32.totalorder %s35, 1
      %p93 = por %p91, %p92
      %p94 = scmp.ne.s32.totalorder %s83, %s84
      %p95 = scmp.eq.s32.totalorder %s35, 0
      %p96 = por %p94, %p95
      %p97 = scmp.ne.s32.totalorder %s83, %s84
      %p98 = scmp.eq.s32.totalorder %s36, 1
      %p99 = por %p97, %p98
      %p101 = scmp.ne.s32.totalorder %s84, %s100
      %p102 = scmp.eq.s32.totalorder %s36, 0
      %p103 = por %p101, %p102
      %s104 = ssub.s32 %s37, %s49
      %s105 = ssub.s32 %s38, %s45
      %s106 = sor.u32 %s104, %s105
      %p107 = scmp.eq.s32.totalorder %s106, 0
      %s109 = sadd.s32 %s108, 1
      %s110 = scalar_select %p107, %s108, %s109
      %p113 = pneg %p107
      %p114 = scmp.eq.s32.totalorder %s30, 1
      %p115 = por %p113, %p114
      %p116 = scmp.ne.s32.totalorder %s108, %s111
      %p117 = scmp.eq.s32.totalorder %s30, 0
      %p118 = por %p116, %p117
      %p119 = scmp.ne.s32.totalorder %s108, %s111
      %p120 = scmp.eq.s32.totalorder %s35, 1
      %p121 = por %p119, %p120
      %p122 = scmp.ne.s32.totalorder %s111, %s112
      %p123 = scmp.eq.s32.totalorder %s35, 0
      %p124 = por %p122, %p123
      %p125 = scmp.ne.s32.totalorder %s111, %s112
      %p126 = scmp.eq.s32.totalorder %s36, 1
      %p127 = por %p125, %p126
      %p129 = scmp.ne.s32.totalorder %s112, %s128
      %p130 = scmp.eq.s32.totalorder %s36, 0
      %p131 = por %p129, %p130
      %s132 = ssub.s32 %s37, %s49
      %p133 = scmp.eq.s32.totalorder %s132, 0
      %s135 = sadd.s32 %s134, 1
      %s136 = scalar_select %p133, %s134, %s135
      %p139 = pneg %p133
      %p140 = scmp.eq.s32.totalorder %s30, 1
      %p141 = por %p139, %p140
      %p142 = scmp.ne.s32.totalorder %s134, %s137
      %p143 = scmp.eq.s32.totalorder %s30, 0
      %p144 = por %p142, %p143
      %p145 = scmp.ne.s32.totalorder %s134, %s137
      %p146 = scmp.eq.s32.totalorder %s35, 1
      %p147 = por %p145, %p146
      %p148 = scmp.ne.s32.totalorder %s137, %s138
      %p149 = scmp.eq.s32.totalorder %s35, 0
      %p150 = por %p148, %p149
      %p151 = scmp.ne.s32.totalorder %s137, %s138
      %p152 = scmp.eq.s32.totalorder %s36, 1
      %p153 = por %p151, %p152
      %p155 = scmp.ne.s32.totalorder %s138, %s154
      %p156 = scmp.eq.s32.totalorder %s36, 0
      %p157 = por %p155, %p156
      %s159 = sadd.s32 %s158, 1
      %p162 = scmp.eq.s32.totalorder %s30, 1
      %p163 = scmp.ne.s32.totalorder %s158, %s160
      %p164 = scmp.eq.s32.totalorder %s30, 0
      %p165 = por %p163, %p164
      %p166 = scmp.ne.s32.totalorder %s158, %s160
      %p167 = scmp.eq.s32.totalorder %s35, 1
      %p168 = por %p166, %p167
      %p169 = scmp.ne.s32.totalorder %s160, %s161
      %p170 = scmp.eq.s32.totalorder %s35, 0
      %p171 = por %p169, %p170
      %p172 = scmp.ne.s32.totalorder %s160, %s161
      %p173 = scmp.eq.s32.totalorder %s36, 1
      %p174 = por %p172, %p173
      %p176 = scmp.ne.s32.totalorder %s161, %s175
      %p177 = scmp.eq.s32.totalorder %s36, 0
      %p178 = por %p176, %p177
      %s180 = sadd.s32 %s179, 1
      %p183 = scmp.eq.s32.totalorder %s30, 1
      %p184 = scmp.ne.s32.totalorder %s179, %s181
      %p185 = scmp.eq.s32.totalorder %s30, 0
      %p186 = por %p184, %p185
      %p187 = scmp.ne.s32.totalorder %s179, %s181
      %p188 = scmp.eq.s32.totalorder %s35, 1
      %p189 = por %p187, %p188
      %p190 = scmp.ne.s32.totalorder %s181, %s182
      %p191 = scmp.eq.s32.totalorder %s35, 0
      %p192 = por %p190, %p191
      %p193 = scmp.ne.s32.totalorder %s181, %s182
      %p194 = scmp.eq.s32.totalorder %s36, 1
      %p195 = por %p193, %p194
      %p197 = scmp.ne.s32.totalorder %s182, %s196
      %p198 = scmp.eq.s32.totalorder %s36, 0
      %p199 = por %p197, %p198
      %s201 = sadd.s32 %s200, 1
      %p204 = scmp.eq.s32.totalorder %s30, 1
      %p205 = scmp.ne.s32.totalorder %s200, %s202
      %p206 = scmp.eq.s32.totalorder %s30, 0
      %p207 = por %p205, %p206
      %p208 = scmp.ne.s32.totalorder %s200, %s202
      %p209 = scmp.eq.s32.totalorder %s35, 1
      %p210 = por %p208, %p209
      %p211 = scmp.ne.s32.totalorder %s202, %s203
      %p212 = scmp.eq.s32.totalorder %s35, 0
      %p213 = por %p211, %p212
      %p214 = scmp.ne.s32.totalorder %s202, %s203
      %p215 = scmp.eq.s32.totalorder %s36, 1
      %p216 = por %p214, %p215
      %p218 = scmp.ne.s32.totalorder %s203, %s217
      %p219 = scmp.eq.s32.totalorder %s36, 0
      %p220 = por %p218, %p219
      %s222 = sadd.s32 %s221, 1
      %p225 = scmp.eq.s32.totalorder %s30, 1
      %p226 = scmp.ne.s32.totalorder %s221, %s223
      %p227 = scmp.eq.s32.totalorder %s30, 0
      %p228 = por %p226, %p227
      %p229 = scmp.ne.s32.totalorder %s221, %s223
      %p230 = scmp.eq.s32.totalorder %s35, 1
      %p231 = por %p229, %p230
      %p232 = scmp.ne.s32.totalorder %s223, %s224
      %p233 = scmp.eq.s32.totalorder %s35, 0
      %p234 = por %p232, %p233
      %p235 = scmp.ne.s32.totalorder %s223, %s224
      %p236 = scmp.eq.s32.totalorder %s36, 1
      %p237 = por %p235, %p236
      %p239 = scmp.ne.s32.totalorder %s224, %s238
      %p240 = scmp.eq.s32.totalorder %s36, 0
      %p241 = por %p239, %p240
      %s243 = sadd.s32 %s242, 1
      %p246 = scmp.eq.s32.totalorder %s30, 1
      %p247 = scmp.ne.s32.totalorder %s242, %s244
      %p248 = scmp.eq.s32.totalorder %s30, 0
      %p249 = por %p247, %p248
      %p250 = scmp.ne.s32.totalorder %s242, %s244
      %p251 = scmp.eq.s32.totalorder %s35, 1
      %p252 = por %p250, %p251
      %p253 = scmp.ne.s32.totalorder %s244, %s245
      %p254 = scmp.eq.s32.totalorder %s35, 0
      %p255 = por %p253, %p254
      %p256 = scmp.ne.s32.totalorder %s244, %s245
      %p257 = scmp.eq.s32.totalorder %s36, 1
      %p258 = por %p256, %p257
      %p260 = scmp.ne.s32.totalorder %s245, %s259
      %p261 = scmp.eq.s32.totalorder %s36, 0
      %p262 = por %p260, %p261
      %s264 = sadd.s32 %s263, 1
      %p267 = scmp.eq.s32.totalorder %s30, 1
      %p268 = scmp.ne.s32.totalorder %s263, %s265
      %p269 = scmp.eq.s32.totalorder %s30, 0
      %p270 = por %p268, %p269
      %p271 = scmp.ne.s32.totalorder %s263, %s265
      %p272 = scmp.eq.s32.totalorder %s35, 1
      %p273 = por %p271, %p272
      %p274 = scmp.ne.s32.totalorder %s265, %s266
      %p275 = scmp.eq.s32.totalorder %s35, 0
      %p276 = por %p274, %p275
      %p277 = scmp.ne.s32.totalorder %s265, %s266
      %p278 = scmp.eq.s32.totalorder %s36, 1
      %p279 = por %p277, %p278
      %p281 = scmp.ne.s32.totalorder %s266, %s280
      %p282 = scmp.eq.s32.totalorder %s36, 0
      %p283 = por %p281, %p282
      %s285 = sadd.s32 %s284, 1
      %p288 = scmp.eq.s32.totalorder %s30, 1
      %p289 = scmp.ne.s32.totalorder %s284, %s286
      %p290 = scmp.eq.s32.totalorder %s30, 0
      %p291 = por %p289, %p290
      %p292 = scmp.ne.s32.totalorder %s284, %s286
      %p293 = scmp.eq.s32.totalorder %s35, 1
      %p294 = por %p292, %p293
      %p295 = scmp.ne.s32.totalorder %s286, %s287
      %p296 = scmp.eq.s32.totalorder %s35, 0
      %p297 = por %p295, %p296
      %p298 = scmp.ne.s32.totalorder %s286, %s287
      %p299 = scmp.eq.s32.totalorder %s36, 1
      %p300 = por %p298, %p299
      %p302 = scmp.ne.s32.totalorder %s287, %s301
      %p303 = scmp.eq.s32.totalorder %s36, 0
      %p304 = por %p302, %p303
      %s306 = sadd.s32 %s305, 1
      %p309 = scmp.eq.s32.totalorder %s30, 1
      %p310 = scmp.ne.s32.totalorder %s305, %s307
      %p311 = scmp.eq.s32.totalorder %s30, 0
      %p312 = por %p310, %p311
      %p313 = scmp.ne.s32.totalorder %s305, %s307
      %p314 = scmp.eq.s32.totalorder %s35, 1
      %p315 = por %p313, %p314
      %p316 = scmp.ne.s32.totalorder %s307, %s308
      %p317 = scmp.eq.s32.totalorder %s35, 0
      %p318 = por %p316, %p317
      %p319 = scmp.ne.s32.totalorder %s307, %s308
      %p320 = scmp.eq.s32.totalorder %s36, 1
      %p321 = por %p319, %p320
      %p323 = scmp.ne.s32.totalorder %s308, %s322
      %p324 = scmp.eq.s32.totalorder %s36, 0
      %p325 = por %p323, %p324
      %s327 = sadd.s32 %s326, 1
      %p330 = scmp.eq.s32.totalorder %s30, 1
      %p331 = scmp.ne.s32.totalorder %s326, %s328
      %p332 = scmp.eq.s32.totalorder %s30, 0
      %p333 = por %p331, %p332
      %p334 = scmp.ne.s32.totalorder %s326, %s328
      %p335 = scmp.eq.s32.totalorder %s35, 1
      %p336 = por %p334, %p335
      %p337 = scmp.ne.s32.totalorder %s328, %s329
      %p338 = scmp.eq.s32.totalorder %s35, 0
      %p339 = por %p337, %p338
      %p340 = scmp.ne.s32.totalorder %s328, %s329
      %p341 = scmp.eq.s32.totalorder %s36, 1
      %p342 = por %p340, %p341
      %p344 = scmp.ne.s32.totalorder %s329, %s343
      %p345 = scmp.eq.s32.totalorder %s36, 0
      %p346 = por %p344, %p345
      %s348 = sadd.s32 %s347, 1
      %p351 = scmp.eq.s32.totalorder %s30, 1
      %p352 = scmp.ne.s32.totalorder %s347, %s349
      %p353 = scmp.eq.s32.totalorder %s30, 0
      %p354 = por %p352, %p353
      %p355 = scmp.ne.s32.totalorder %s347, %s349
      %p356 = scmp.eq.s32.totalorder %s35, 1
      %p357 = por %p355, %p356
      %p358 = scmp.ne.s32.totalorder %s349, %s350
      %p359 = scmp.eq.s32.totalorder %s35, 0
      %p360 = por %p358, %p359
      %p361 = scmp.ne.s32.totalorder %s349, %s350
      %p362 = scmp.eq.s32.totalorder %s36, 1
      %p363 = por %p361, %p362
      %p365 = scmp.ne.s32.totalorder %s350, %s364
      %p366 = scmp.eq.s32.totalorder %s36, 0
      %p367 = por %p365, %p366
      %s369 = sadd.s32 %s368, 1
      %p372 = scmp.eq.s32.totalorder %s30, 1
      %p373 = scmp.ne.s32.totalorder %s368, %s370
      %p374 = scmp.eq.s32.totalorder %s30, 0
      %p375 = por %p373, %p374
      %p376 = scmp.ne.s32.totalorder %s368, %s370
      %p377 = scmp.eq.s32.totalorder %s35, 1
      %p378 = por %p376, %p377
      %p379 = scmp.ne.s32.totalorder %s370, %s371
      %p380 = scmp.eq.s32.totalorder %s35, 0
      %p381 = por %p379, %p380
      %p382 = scmp.ne.s32.totalorder %s370, %s371
      %p383 = scmp.eq.s32.totalorder %s36, 1
      %p384 = por %p382, %p383
      %p386 = scmp.ne.s32.totalorder %s371, %s385
      %p387 = scmp.eq.s32.totalorder %s36, 0
      %p388 = por %p386, %p387
      %s390 = sadd.s32 %s389, 1
      %p393 = scmp.eq.s32.totalorder %s30, 1
      %p394 = scmp.ne.s32.totalorder %s389, %s391
      %p395 = scmp.eq.s32.totalorder %s30, 0
      %p396 = por %p394, %p395
      %p397 = scmp.ne.s32.totalorder %s389, %s391
      %p398 = scmp.eq.s32.totalorder %s35, 1
      %p399 = por %p397, %p398
      %p400 = scmp.ne.s32.totalorder %s391, %s392
      %p401 = scmp.eq.s32.totalorder %s35, 0
      %p402 = por %p400, %p401
      %p403 = scmp.ne.s32.totalorder %s391, %s392
      %p404 = scmp.eq.s32.totalorder %s36, 1
      %p405 = por %p403, %p404
      %p407 = scmp.ne.s32.totalorder %s392, %s406
      %p408 = scmp.eq.s32.totalorder %s36, 0
      %p409 = por %p407, %p408
      %s410 = ssub.s32 %s37, %s49
      %s411 = ssub.s32 %s38, %s45
      %s412 = sor.u32 %s410, %s411
      %p413 = scmp.eq.s32.totalorder %s412, 0
      %s415 = sadd.s32 %s414, 1
      %s416 = scalar_select %p413, %s414, %s415
      %p419 = pneg %p413
      %p420 = scmp.eq.s32.totalorder %s30, 1
      %p421 = por %p419, %p420
      %p422 = scmp.ne.s32.totalorder %s414, %s417
      %p423 = scmp.eq.s32.totalorder %s30, 0
      %p424 = por %p422, %p423
      %p425 = scmp.ne.s32.totalorder %s414, %s417
      %p426 = scmp.eq.s32.totalorder %s35, 1
      %p427 = por %p425, %p426
      %p428 = scmp.ne.s32.totalorder %s417, %s418
      %p429 = scmp.eq.s32.totalorder %s35, 0
      %p430 = por %p428, %p429
      %p431 = scmp.ne.s32.totalorder %s417, %s418
      %p432 = scmp.eq.s32.totalorder %s36, 1
      %p433 = por %p431, %p432
      %p435 = scmp.ne.s32.totalorder %s418, %s434
      %p436 = scmp.eq.s32.totalorder %s36, 0
      %p437 = por %p435, %p436
      %p438 = scmp.le.s32.totalorder 1, %s30
      %p439 = scmp.lt.s32.totalorder %s30, 3
      %p440 = pnand %p438, %p439
      %p441 = pneg %p440
      // Predicated region
      $region9: #{tpu_custom_call.1} parent=5 // pred_check
        _
      $region10: #{tpu_custom_call.1} parent=5 // pred_check_branch
        %443 = sbr.rel (%p440) target = $region12
      $region11: #{tpu_custom_call.1} parent=5 // pred_region
        %s444 = ssub.s32 %s30, 1
        // Predicated region
        $region13: #{tpu_custom_call.1} parent=11 // pred_check
          %p445 = pneg %p171
        $region14: #{tpu_custom_call.1} parent=11 // pred_check_branch
          %447 = sbr.rel (%p445) target = $region16
        $region15: #{tpu_custom_call.1} parent=11 // pred_region
          %449 = vsyncadd [#allocation7], 0
          %s450 = sshll.u32 %s4, 4
          %s451 = int_to_ptr.hbm [resolvable:$true] %s450
          %s452 = sshll.u32 [#allocation6], 4
          %s453 = int_to_ptr.vmem [resolvable:$true] %s452
          %458 = dma.hbm_to_vmem [thread:$0]  %s451, 256, %s453, [#allocation7], 64, 64, 4
        $region16: #{tpu_custom_call.1} parent=11 // pred_fallthru
          _
        // Predicated region
        $region17: #{tpu_custom_call.1} parent=11 // pred_check
          %p459 = pneg %p192
        $region18: #{tpu_custom_call.1} parent=11 // pred_check_branch
          %461 = sbr.rel (%p459) target = $region20
        $region19: #{tpu_custom_call.1} parent=11 // pred_region
          _
        $region20: #{tpu_custom_call.1} parent=11 // pred_fallthru
          _
        // Predicated region
        $region21: #{tpu_custom_call.1} parent=11 // pred_check
          %p462 = pneg %p213
        $region22: #{tpu_custom_call.1} parent=11 // pred_check_branch
          %464 = sbr.rel (%p462) target = $region24
        $region23: #{tpu_custom_call.1} parent=11 // pred_region
          %466 = vsyncadd [#allocation7], 0
          %s467 = sshll.u32 %s6, 4
          %s468 = int_to_ptr.hbm [resolvable:$true] %s467
          %s469 = sshll.u32 [#allocation8], 4
          %s470 = int_to_ptr.vmem [resolvable:$true] %s469
          %475 = dma.hbm_to_vmem [thread:$0]  %s468, 256, %s470, [#allocation7], 64, 64, 4
        $region24: #{tpu_custom_call.1} parent=11 // pred_fallthru
          _
        // Predicated region
        $region25: #{tpu_custom_call.1} parent=11 // pred_check
          %p476 = pneg %p234
        $region26: #{tpu_custom_call.1} parent=11 // pred_check_branch
          %478 = sbr.rel (%p476) target = $region28
        $region27: #{tpu_custom_call.1} parent=11 // pred_region
          _
        $region28: #{tpu_custom_call.1} parent=11 // pred_fallthru
          _
        // Predicated region
        $region29: #{tpu_custom_call.1} parent=11 // pred_check
          %p479 = pneg %p255
        $region30: #{tpu_custom_call.1} parent=11 // pred_check_branch
          %481 = sbr.rel (%p479) target = $region32
        $region31: #{tpu_custom_call.1} parent=11 // pred_region
          _
        $region32: #{tpu_custom_call.1} parent=11 // pred_fallthru
          _
        // Predicated region
        $region33: #{tpu_custom_call.1} parent=11 // pred_check
          %p482 = pneg %p276
        $region34: #{tpu_custom_call.1} parent=11 // pred_check_branch
          %484 = sbr.rel (%p482) target = $region36
        $region35: #{tpu_custom_call.1} parent=11 // pred_region
          _
        $region36: #{tpu_custom_call.1} parent=11 // pred_fallthru
          _
        // Predicated region
        $region37: #{tpu_custom_call.1} parent=11 // pred_check
          %p485 = pneg %p297
        $region38: #{tpu_custom_call.1} parent=11 // pred_check_branch
          %487 = sbr.rel (%p485) target = $region40
        $region39: #{tpu_custom_call.1} parent=11 // pred_region
          _
        $region40: #{tpu_custom_call.1} parent=11 // pred_fallthru
          _
        // Predicated region
        $region41: #{tpu_custom_call.1} parent=11 // pred_check
          %p488 = pneg %p318
        $region42: #{tpu_custom_call.1} parent=11 // pred_check_branch
          %490 = sbr.rel (%p488) target = $region44
        $region43: #{tpu_custom_call.1} parent=11 // pred_region
          _
        $region44: #{tpu_custom_call.1} parent=11 // pred_fallthru
          _
        // Predicated region
        $region45: #{tpu_custom_call.1} parent=11 // pred_check
          %p491 = pneg %p339
        $region46: #{tpu_custom_call.1} parent=11 // pred_check_branch
          %493 = sbr.rel (%p491) target = $region48
        $region47: #{tpu_custom_call.1} parent=11 // pred_region
          %495 = vsyncadd [#allocation10], 0
          %s496 = sshll.u32 %s12, 4
          %s497 = int_to_ptr.hbm [resolvable:$true] %s496
          %s498 = sshll.u32 [#allocation9], 4
          %s499 = int_to_ptr.vmem [resolvable:$true] %s498
          %504 = dma.hbm_to_vmem [thread:$0]  %s497, 256, %s499, [#allocation10], 64, 64, 4
        $region48: #{tpu_custom_call.1} parent=11 // pred_fallthru
          _
        // Predicated region
        $region49: #{tpu_custom_call.1} parent=11 // pred_check
          %p505 = pneg %p360
        $region50: #{tpu_custom_call.1} parent=11 // pred_check_branch
          %507 = sbr.rel (%p505) target = $region52
        $region51: #{tpu_custom_call.1} parent=11 // pred_region
          _
        $region52: #{tpu_custom_call.1} parent=11 // pred_fallthru
          _
        // Predicated region
        $region53: #{tpu_custom_call.1} parent=11 // pred_check
          %p508 = pneg %p381
        $region54: #{tpu_custom_call.1} parent=11 // pred_check_branch
          %510 = sbr.rel (%p508) target = $region56
        $region55: #{tpu_custom_call.1} parent=11 // pred_region
          _
        $region56: #{tpu_custom_call.1} parent=11 // pred_fallthru
          _
        // Predicated region
        $region57: #{tpu_custom_call.1} parent=11 // pred_check
          %p511 = pneg %p402
        $region58: #{tpu_custom_call.1} parent=11 // pred_check_branch
          %513 = sbr.rel (%p511) target = $region60
        $region59: #{tpu_custom_call.1} parent=11 // pred_region
          _
        $region60: #{tpu_custom_call.1} parent=11 // pred_fallthru
          _
      $region12: #{tpu_custom_call.1} parent=5 // pred_fallthru
        _
      %p514 = scmp.lt.s32.totalorder %s30, 2
      // Predicated region
      $region61: #{tpu_custom_call.1} parent=5 // pred_check
        %p515 = pneg %p514
      $region62: #{tpu_custom_call.1} parent=5 // pred_check_branch
        %517 = sbr.rel (%p515) target = $region64
      $region63: #{tpu_custom_call.1} parent=5 // pred_region
        // Predicated region
        $region65: #{tpu_custom_call.1} parent=63 // pred_check
          %p518 = pneg %p64
        $region66: #{tpu_custom_call.1} parent=63 // pred_check_branch
          %520 = sbr.rel (%p518) target = $region68
        $region67: #{tpu_custom_call.1} parent=63 // pred_region
          %p521 = scmp.lt.s32.totalorder %s37, 1
          %s522 = scalar_select %p521, %s37, 1
          %p523 = scmp.lt.s32.totalorder %s38, 0
          %s524 = scalar_select %p523, %s38, 0
          %s525 = sadd.s32 %s524, %s522
          %s526 = smul.addr %s525, 8
          %s527 = scalar_lea.vmem %s0, %s526
        $region68: #{tpu_custom_call.1} parent=63 // pred_fallthru
          _
        // Predicated region
        $region69: #{tpu_custom_call.1} parent=63 // pred_check
          %p528 = pneg %p90
        $region70: #{tpu_custom_call.1} parent=63 // pred_check_branch
          %530 = sbr.rel (%p528) target = $region72
        $region71: #{tpu_custom_call.1} parent=63 // pred_region
          %p531 = scmp.lt.s32.totalorder %s37, 1
          %s532 = scalar_select %p531, %s37, 1
          %s533 = smul.addr %s532, 8
          %s534 = scalar_lea.vmem %s1, %s533
        $region72: #{tpu_custom_call.1} parent=63 // pred_fallthru
          _
        // Predicated region
        $region73: #{tpu_custom_call.1} parent=63 // pred_check
          %p535 = pneg %p118
        $region74: #{tpu_custom_call.1} parent=63 // pred_check_branch
          %537 = sbr.rel (%p535) target = $region76
        $region75: #{tpu_custom_call.1} parent=63 // pred_region
          %p538 = scmp.lt.s32.totalorder %s37, 1
          %s539 = scalar_select %p538, %s37, 1
          %p540 = scmp.lt.s32.totalorder %s38, 0
          %s541 = scalar_select %p540, %s38, 0
          %s542 = sadd.s32 %s541, %s539
          %s543 = smul.addr %s542, 8
          %s544 = scalar_lea.vmem %s2, %s543
        $region76: #{tpu_custom_call.1} parent=63 // pred_fallthru
          _
        // Predicated region
        $region77: #{tpu_custom_call.1} parent=63 // pred_check
          %p545 = pneg %p144
        $region78: #{tpu_custom_call.1} parent=63 // pred_check_branch
          %547 = sbr.rel (%p545) target = $region80
        $region79: #{tpu_custom_call.1} parent=63 // pred_region
          %s548 = sand.u32 %s134, 1
          %s549 = scalar_lea.sflag [#allocation4], %s548
          %s550 = sand.u32 %s134, 1
          %s551 = smul.addr %s550, 8
          %s552 = scalar_lea.vmem [#allocation3], %s551
          %554 = vsyncadd %s549, 0
          %s555 = smul.addr %s37, 8
          %s556 = scalar_lea.hbm %s3, %s555
          %s558 = sshll.u32 %s556, 4
          %s559 = int_to_ptr.hbm [resolvable:$true] %s558
          %s560 = sshll.u32 %s552, 4
          %s561 = int_to_ptr.vmem [resolvable:$true] %s560
          %563 = dma.hbm_to_vmem [thread:$0]  %s559, 128, %s561, %s549
        $region80: #{tpu_custom_call.1} parent=63 // pred_fallthru
          _
      $region64: #{tpu_custom_call.1} parent=5 // pred_fallthru
        _
      %p564 = scmp.le.s32.totalorder 1, %s30
      %p565 = scmp.lt.s32.totalorder %s30, 3
      %p566 = pnand %p564, %p565
      %p567 = pneg %p566
      // Predicated region
      $region81: #{tpu_custom_call.1} parent=5 // pred_check
        _
      $region82: #{tpu_custom_call.1} parent=5 // pred_check_branch
        %569 = sbr.rel (%p566) target = $region84
      $region83: #{tpu_custom_call.1} parent=5 // pred_region
        %s570 = ssub.s32 %s30, 1
        %s571 = sand.u32 %s137, 1
        %s572 = scalar_lea.sflag [#allocation4], %s571
        %s573 = sand.u32 %s137, 1
        %s574 = smul.addr %s573, 8
        %s575 = scalar_lea.vmem [#allocation3], %s574
        // Predicated region
        $region85: #{tpu_custom_call.1} parent=83 // pred_check
          %p576 = pneg %p150
        $region86: #{tpu_custom_call.1} parent=83 // pred_check_branch
          %578 = sbr.rel (%p576) target = $region88
        $region87: #{tpu_custom_call.1} parent=83 // pred_region
          %580 = dma.done %s572, 128
        $region88: #{tpu_custom_call.1} parent=83 // pred_fallthru
          _
        // Predicated region
        $region89: #{tpu_custom_call.1} parent=83 // pred_check
          %p581 = pneg %p171
        $region90: #{tpu_custom_call.1} parent=83 // pred_check_branch
          %583 = sbr.rel (%p581) target = $region92
        $region91: #{tpu_custom_call.1} parent=83 // pred_region
          %585 = dma.done [#allocation7], 256
        $region92: #{tpu_custom_call.1} parent=83 // pred_fallthru
          _
        // Predicated region
        $region93: #{tpu_custom_call.1} parent=83 // pred_check
          %p586 = pneg %p213
        $region94: #{tpu_custom_call.1} parent=83 // pred_check_branch
          %588 = sbr.rel (%p586) target = $region96
        $region95: #{tpu_custom_call.1} parent=83 // pred_region
          %590 = dma.done [#allocation7], 256
        $region96: #{tpu_custom_call.1} parent=83 // pred_fallthru
          _
        // Predicated region
        $region97: #{tpu_custom_call.1} parent=83 // pred_check
          %p591 = pneg %p339
        $region98: #{tpu_custom_call.1} parent=83 // pred_check_branch
          %593 = sbr.rel (%p591) target = $region100
        $region99: #{tpu_custom_call.1} parent=83 // pred_region
          %595 = dma.done [#allocation10], 256
        $region100: #{tpu_custom_call.1} parent=83 // pred_fallthru
          _
        %p596 = scmp.lt.s32.totalorder %s39, 1
        %s597 = scalar_select %p596, %s39, 1
        %p598 = scmp.lt.s32.totalorder %s40, 0
        %s599 = scalar_select %p598, %s40, 0
        %s600 = sadd.s32 %s599, %s597
        %s601 = smul.addr %s600, 8
        %s602 = scalar_lea.vmem %s0, %s601
        %p603 = pneg %p70
        %p604 = pneg %p67
        %p605 = scmp.lt.s32.totalorder %s39, 1
        %s606 = scalar_select %p605, %s39, 1
        %s607 = smul.addr %s606, 8
        %s608 = scalar_lea.vmem %s1, %s607
        %p609 = pneg %p96
        %p610 = pneg %p93
        %p611 = scmp.lt.s32.totalorder %s39, 1
        %s612 = scalar_select %p611, %s39, 1
        %p613 = scmp.lt.s32.totalorder %s40, 0
        %s614 = scalar_select %p613, %s40, 0
        %s615 = sadd.s32 %s614, %s612
        %s616 = smul.addr %s615, 8
        %s617 = scalar_lea.vmem %s2, %s616
        %p618 = pneg %p124
        %p619 = pneg %p121
        %s620 = sand.u32 %s137, 1
        %s621 = scalar_lea.sflag [#allocation4], %s620
        %s622 = sand.u32 %s137, 1
        %s623 = smul.addr %s622, 8
        %s624 = scalar_lea.vmem [#allocation3], %s623
        %p625 = pneg %p150
        %p626 = pneg %p147
        %p627 = pneg %p171
        %p628 = pneg %p168
        %p629 = pneg %p192
        %p630 = pneg %p189
        %p631 = pneg %p213
        %p632 = pneg %p210
        %p633 = pneg %p234
        %p634 = pneg %p231
        %p635 = pneg %p255
        %p636 = pneg %p252
        %p637 = pneg %p276
        %p638 = pneg %p273
        %p639 = pneg %p297
        %p640 = pneg %p294
        %p641 = pneg %p318
        %p642 = pneg %p315
        %p643 = pneg %p339
        %p644 = pneg %p336
        %p645 = pneg %p360
        %p646 = pneg %p357
        %p647 = pneg %p381
        %p648 = pneg %p378
        %p649 = pneg %p402
        %p650 = pneg %p399
        %p651 = pneg %p430
        %p652 = pneg %p427
        %s653 = sand.u32 %s417, 1
        %s654 = scalar_lea.sflag [#allocation5], %s653
        %s655 = sand.u32 %s417, 1
        %s656 = smul.addr %s655, 8
        %s657 = scalar_lea.vmem [#allocation11], %s656
        %p658 = scmp.lt.s32.totalorder %s39, 1
        %s659 = scalar_select %p658, %s39, 1
        %p660 = scmp.lt.s32.totalorder %s40, 0
        %s661 = scalar_select %p660, %s40, 0
        %s662 = sadd.s32 %s661, %s659
        %s663 = smul.addr %s662, 8
        %s664 = scalar_lea.vmem %s0, %s663
        %p665 = scmp.lt.s32.totalorder %s39, 1
        %s666 = scalar_select %p665, %s39, 1
        %s667 = smul.addr %s666, 8
        %s668 = scalar_lea.vmem %s1, %s667
        %p669 = scmp.lt.s32.totalorder %s39, 1
        %s670 = scalar_select %p669, %s39, 1
        %p671 = scmp.lt.s32.totalorder %s40, 0
        %s672 = scalar_select %p671, %s40, 0
        %s673 = sadd.s32 %s672, %s670
        %s674 = smul.addr %s673, 8
        %s675 = scalar_lea.vmem %s2, %s674
        %v677 = vld [vmem:[%s664] sm:$0xff]
        %v678 = vld [vmem:[%s668] sm:$0xff]
        %v679 = vld [vmem:[%s675] sm:$0xff]
        %v680 = vadd.f32 %v677, %v679
        %v681 = vpack.c.bf16 %v680, %v680
        %v682 = vld [vmem:[%s575] sm:$0xff]
        %v683 = vadd.f32 %v678, %v682
        %v684 = vpack.c.bf16 %v683, %v683
        %v685 = vpack.c.bf16 %v678, %v678
        %v686 = vld [vmem:[#allocation6] sm:$0xf]
        %v687 = vld [vmem:[#allocation6 + $0x4] sm:$0xf]
        %v688 = vld [vmem:[#allocation6 + $0x8] sm:$0xf]
        %v689 = vld [vmem:[#allocation6 + $0xc] sm:$0xf]
        %v690 = vld [vmem:[%s5] sm:$0x1]
        %v692 = vperm.slane %v690, 0
        %v698 = vunpack.c.l.b16 %v686
        %v699 = vunpack.c.l.b16 %v687
        %v700 = vunpack.c.l.b16 %v688
        %v701 = vunpack.c.l.b16 %v689
        %v702 = vpack.c.b16 %v699, %v698
        %v703 = vpack.c.b16 %v701, %v700
        %vm706 = vcmask 261120
        %v708 = vsel %vm706, %v681, 0
        %710 = vmatpush.bf16.msra.mxu0 0
        %711 = vmatpush.bf16.msra.mxu0 0
        %712 = vmatpush.bf16.msra.mxu0 0
        %713 = vmatpush.bf16.msra.mxu0 0
        %714 = vmatpush.bf16.msra.mxu0 0
        %715 = vmatpush.bf16.msra.mxu0 0
        %716 = vmatpush.bf16.msra.mxu0 %v703
        %717 = vmatpush.bf16.msra.mxu0 %v702
        %718 = vmatmul.bf16.gmra.mxu0 %v708
        %v719 = vpop.f32.mrf.mxu0
        %v720 = vadd.f32 %v692, %v719
        %v721 = vpop.f32.mrf.mxu0
        %722 = vdwg.mxu0
        %v723 = vpack.c.bf16 %v720, %v720
        %724 = vrot.lane.b32.xlu0 %v702, 96
        %v725 = vpop.permute.xlu0 %724
        %726 = vrot.lane.b32.xlu0 %v703, 96
        %v727 = vpop.permute.xlu0 %726
        %730 = vrot.lane.b32.xlu0 %v692, 96
        %v731 = vpop.permute.xlu0 %730
        %v734 = vsel %vm706, %v684, 0
        %736 = vmatpush.bf16.msra.mxu0 0
        %737 = vmatpush.bf16.msra.mxu0 0
        %738 = vmatpush.bf16.msra.mxu0 0
        %739 = vmatpush.bf16.msra.mxu0 0
        %740 = vmatpush.bf16.msra.mxu0 0
        %741 = vmatpush.bf16.msra.mxu0 0
        %742 = vmatpush.bf16.msra.mxu0 %v727
        %743 = vmatpush.bf16.msra.mxu0 %v725
        %744 = vmatmul.bf16.gmra.mxu0 %v734
        %v745 = vpop.f32.mrf.mxu0
        %v746 = vadd.f32 %v731, %v745
        %v747 = vpop.f32.mrf.mxu0
        %748 = vdwg.mxu0
        %v749 = vpack.c.bf16 %v746, %v746
        %750 = vrot.lane.b32.xlu0 %v702, 64
        %v751 = vpop.permute.xlu0 %750
        %752 = vrot.lane.b32.xlu0 %v703, 64
        %v753 = vpop.permute.xlu0 %752
        %756 = vrot.lane.b32.xlu0 %v692, 64
        %v757 = vpop.permute.xlu0 %756
        %v760 = vsel %vm706, %v685, 0
        %762 = vmatpush.bf16.msra.mxu0 0
        %763 = vmatpush.bf16.msra.mxu0 0
        %764 = vmatpush.bf16.msra.mxu0 0
        %765 = vmatpush.bf16.msra.mxu0 0
        %766 = vmatpush.bf16.msra.mxu0 0
        %767 = vmatpush.bf16.msra.mxu0 0
        %768 = vmatpush.bf16.msra.mxu0 %v753
        %769 = vmatpush.bf16.msra.mxu0 %v751
        %770 = vmatmul.bf16.gmra.mxu0 %v760
        %v771 = vpop.f32.mrf.mxu0
        %v772 = vadd.f32 %v757, %v771
        %v773 = vpop.f32.mrf.mxu0
        %774 = vdwg.mxu0
        %v775 = vpack.c.bf16 %v772, %v772
        %vm776 = vcmask 64512
        %v778 = vsel %vm776, %v723, 0
        %v781 = vsel %vm776, %v749, 0
        %783 = vmatpush.bf16.xpose.msra.mxu0 0
        %784 = vmatpush.bf16.xpose.msra.mxu0 0
        %785 = vmatpush.bf16.xpose.msra.mxu0 0
        %786 = vmatpush.bf16.xpose.msra.mxu0 0
        %787 = vmatpush.bf16.xpose.msra.mxu0 0
        %788 = vmatpush.bf16.xpose.msra.mxu0 0
        %789 = vmatpush.bf16.xpose.msra.mxu0 0
        %790 = vmatpush.bf16.xpose.msra.mxu0 %v781
        %791 = vmatmul.bf16.gmra.mxu0 %v778
        %v792 = vpop.f32.mrf.mxu0
        %v793 = vadd.f32 0.0, %v792
        %v794 = vpop.f32.mrf.mxu0
        %795 = vdwg.mxu0
        %v796 = vmul.f32 %v793, 0.35355338
        %v797 = vsel %vm776, %v796, -inf
        %798 = vmax.xlane.f32.xlu0 %v797
        %v799 = vpop.xlane.xlu0 %798
        %v800 = vsub.f32 %v796, %v799
        %v801 = vmul.f32 %v800, 1.442695
        %v802 = vpow.pop %v801
        %v803 = vsel %vm776, %v802, 0.0
        %804 = vadd.xlane.f32.xlu0 %v803
        %v805 = vpop.xlane.xlu0 %804
        %v806 = vrcp.pop %v805
        %v807 = vmul.f32 %v802, %v806
        %v808 = vpack.c.bf16 %v807, %v807
        %v810 = vsel %vm776, %v808, 0
        %vm812 = vcmask 1043456
        %v814 = vsel %vm812, %v775, 0
        %816 = vmatpush.bf16.msra.mxu0 0
        %817 = vmatpush.bf16.msra.mxu0 0
        %818 = vmatpush.bf16.msra.mxu0 0
        %819 = vmatpush.bf16.msra.mxu0 0
        %820 = vmatpush.bf16.msra.mxu0 0
        %821 = vmatpush.bf16.msra.mxu0 0
        %822 = vmatpush.bf16.msra.mxu0 0
        %823 = vmatpush.bf16.msra.mxu0 %v814
        %824 = vmatmul.bf16.gmra.mxu0 %v810
        %v825 = vpop.f32.mrf.mxu0
        %v826 = vadd.f32 0.0, %v825
        %v827 = vpop.f32.mrf.mxu0
        %828 = vdwg.mxu0
        %829 = vst.msk [vmem:[#allocation2] sm:$0xff] %vm776, %v826
        %v831 = vunpack.c.l.b16 %v723
        %v832 = vpack.c.b16 %v831, %v831
        %833 = vrot.lane.b32.xlu0 %v832, 120
        %v834 = vpop.permute.xlu0 %833
        %v836 = vunpack.c.l.b16 %v749
        %v837 = vpack.c.b16 %v836, %v836
        %838 = vrot.lane.b32.xlu0 %v837, 120
        %v839 = vpop.permute.xlu0 %838
        %v841 = vsel %vm776, %v834, 0
        %v844 = vsel %vm776, %v839, 0
        %846 = vmatpush.bf16.xpose.msra.mxu0 0
        %847 = vmatpush.bf16.xpose.msra.mxu0 0
        %848 = vmatpush.bf16.xpose.msra.mxu0 0
        %849 = vmatpush.bf16.xpose.msra.mxu0 0
        %850 = vmatpush.bf16.xpose.msra.mxu0 0
        %851 = vmatpush.bf16.xpose.msra.mxu0 0
        %852 = vmatpush.bf16.xpose.msra.mxu0 0
        %853 = vmatpush.bf16.xpose.msra.mxu0 %v844
        %854 = vmatmul.bf16.gmra.mxu0 %v841
        %v855 = vpop.f32.mrf.mxu0
        %v856 = vadd.f32 0.0, %v855
        %v857 = vpop.f32.mrf.mxu0
        %858 = vdwg.mxu0
        %v859 = vmul.f32 %v856, 0.35355338
        %v860 = vsel %vm776, %v859, -inf
        %861 = vmax.xlane.f32.xlu0 %v860
        %v862 = vpop.xlane.xlu0 %861
        %v863 = vsub.f32 %v859, %v862
        %v864 = vmul.f32 %v863, 1.442695
        %v865 = vpow.pop %v864
        %v866 = vsel %vm776, %v865, 0.0
        %867 = vadd.xlane.f32.xlu0 %v866
        %v868 = vpop.xlane.xlu0 %867
        %v869 = vrcp.pop %v868
        %v870 = vmul.f32 %v865, %v869
        %v871 = vpack.c.bf16 %v870, %v870
        %v873 = vunpack.c.l.b16 %v775
        %v874 = vpack.c.b16 %v873, %v873
        %875 = vrot.lane.b32.xlu0 %v874, 120
        %v876 = vpop.permute.xlu0 %875
        %v878 = vsel %vm776, %v871, 0
        %v881 = vsel %vm812, %v876, 0
        %883 = vmatpush.bf16.msra.mxu0 0
        %884 = vmatpush.bf16.msra.mxu0 0
        %885 = vmatpush.bf16.msra.mxu0 0
        %886 = vmatpush.bf16.msra.mxu0 0
        %887 = vmatpush.bf16.msra.mxu0 0
        %888 = vmatpush.bf16.msra.mxu0 0
        %889 = vmatpush.bf16.msra.mxu0 0
        %890 = vmatpush.bf16.msra.mxu0 %v881
        %891 = vmatmul.bf16.gmra.mxu0 %v878
        %v892 = vpop.f32.mrf.mxu0
        %v893 = vadd.f32 0.0, %v892
        %v894 = vpop.f32.mrf.mxu0
        %895 = vdwg.mxu0
        %897 = vrot.lane.b32.xlu0 %v893, 8
        %v898 = vpop.permute.xlu0 %897
        %vm900 = vcmask 130112
        %901 = vst.msk [vmem:[#allocation2] sm:$0xff] %vm900, %v898
        %902 = vrot.lane.b32.xlu0 %v832, 112
        %v903 = vpop.permute.xlu0 %902
        %904 = vrot.lane.b32.xlu0 %v837, 112
        %v905 = vpop.permute.xlu0 %904
        %v907 = vsel %vm776, %v903, 0
        %v910 = vsel %vm776, %v905, 0
        %912 = vmatpush.bf16.xpose.msra.mxu0 0
        %913 = vmatpush.bf16.xpose.msra.mxu0 0
        %914 = vmatpush.bf16.xpose.msra.mxu0 0
        %915 = vmatpush.bf16.xpose.msra.mxu0 0
        %916 = vmatpush.bf16.xpose.msra.mxu0 0
        %917 = vmatpush.bf16.xpose.msra.mxu0 0
        %918 = vmatpush.bf16.xpose.msra.mxu0 0
        %919 = vmatpush.bf16.xpose.msra.mxu0 %v910
        %920 = vmatmul.bf16.gmra.mxu0 %v907
        %v921 = vpop.f32.mrf.mxu0
        %v922 = vadd.f32 0.0, %v921
        %v923 = vpop.f32.mrf.mxu0
        %924 = vdwg.mxu0
        %v925 = vmul.f32 %v922, 0.35355338
        %v926 = vsel %vm776, %v925, -inf
        %927 = vmax.xlane.f32.xlu0 %v926
        %v928 = vpop.xlane.xlu0 %927
        %v929 = vsub.f32 %v925, %v928
        %v930 = vmul.f32 %v929, 1.442695
        %v931 = vpow.pop %v930
        %v932 = vsel %vm776, %v931, 0.0
        %933 = vadd.xlane.f32.xlu0 %v932
        %v934 = vpop.xlane.xlu0 %933
        %v935 = vrcp.pop %v934
        %v936 = vmul.f32 %v931, %v935
        %v937 = vpack.c.bf16 %v936, %v936
        %938 = vrot.lane.b32.xlu0 %v874, 112
        %v939 = vpop.permute.xlu0 %938
        %v941 = vsel %vm776, %v937, 0
        %v944 = vsel %vm812, %v939, 0
        %946 = vmatpush.bf16.msra.mxu0 0
        %947 = vmatpush.bf16.msra.mxu0 0
        %948 = vmatpush.bf16.msra.mxu0 0
        %949 = vmatpush.bf16.msra.mxu0 0
        %950 = vmatpush.bf16.msra.mxu0 0
        %951 = vmatpush.bf16.msra.mxu0 0
        %952 = vmatpush.bf16.msra.mxu0 0
        %953 = vmatpush.bf16.msra.mxu0 %v944
        %954 = vmatmul.bf16.gmra.mxu0 %v941
        %v955 = vpop.f32.mrf.mxu0
        %v956 = vadd.f32 0.0, %v955
        %v957 = vpop.f32.mrf.mxu0
        %958 = vdwg.mxu0
        %960 = vrot.lane.b32.xlu0 %v956, 16
        %v961 = vpop.permute.xlu0 %960
        %vm963 = vcmask 195712
        %964 = vst.msk [vmem:[#allocation2] sm:$0xff] %vm963, %v961
        %965 = vrot.lane.b32.xlu0 %v832, 104
        %v966 = vpop.permute.xlu0 %965
        %967 = vrot.lane.b32.xlu0 %v837, 104
        %v968 = vpop.permute.xlu0 %967
        %v970 = vsel %vm776, %v966, 0
        %v973 = vsel %vm776, %v968, 0
        %975 = vmatpush.bf16.xpose.msra.mxu0 0
        %976 = vmatpush.bf16.xpose.msra.mxu0 0
        %977 = vmatpush.bf16.xpose.msra.mxu0 0
        %978 = vmatpush.bf16.xpose.msra.mxu0 0
        %979 = vmatpush.bf16.xpose.msra.mxu0 0
        %980 = vmatpush.bf16.xpose.msra.mxu0 0
        %981 = vmatpush.bf16.xpose.msra.mxu0 0
        %982 = vmatpush.bf16.xpose.msra.mxu0 %v973
        %983 = vmatmul.bf16.gmra.mxu0 %v970
        %v984 = vpop.f32.mrf.mxu0
        %v985 = vadd.f32 0.0, %v984
        %v986 = vpop.f32.mrf.mxu0
        %987 = vdwg.mxu0
        %v988 = vmul.f32 %v985, 0.35355338
        %v989 = vsel %vm776, %v988, -inf
        %990 = vmax.xlane.f32.xlu0 %v989
        %v991 = vpop.xlane.xlu0 %990
        %v992 = vsub.f32 %v988, %v991
        %v993 = vmul.f32 %v992, 1.442695
        %v994 = vpow.pop %v993
        %v995 = vsel %vm776, %v994, 0.0
        %996 = vadd.xlane.f32.xlu0 %v995
        %v997 = vpop.xlane.xlu0 %996
        %v998 = vrcp.pop %v997
        %v999 = vmul.f32 %v994, %v998
        %v1000 = vpack.c.bf16 %v999, %v999
        %1001 = vrot.lane.b32.xlu0 %v874, 104
        %v1002 = vpop.permute.xlu0 %1001
        %v1004 = vsel %vm776, %v1000, 0
        %v1007 = vsel %vm812, %v1002, 0
        %1009 = vmatpush.bf16.msra.mxu0 0
        %1010 = vmatpush.bf16.msra.mxu0 0
        %1011 = vmatpush.bf16.msra.mxu0 0
        %1012 = vmatpush.bf16.msra.mxu0 0
        %1013 = vmatpush.bf16.msra.mxu0 0
        %1014 = vmatpush.bf16.msra.mxu0 0
        %1015 = vmatpush.bf16.msra.mxu0 0
        %1016 = vmatpush.bf16.msra.mxu0 %v1007
        %1017 = vmatmul.bf16.gmra.mxu0 %v1004
        %v1018 = vpop.f32.mrf.mxu0
        %v1019 = vadd.f32 0.0, %v1018
        %v1020 = vpop.f32.mrf.mxu0
        %1021 = vdwg.mxu0
        %1023 = vrot.lane.b32.xlu0 %v1019, 24
        %v1024 = vpop.permute.xlu0 %1023
        %vm1026 = vcmask 261312
        %1027 = vst.msk [vmem:[#allocation2] sm:$0xff] %vm1026, %v1024
        %v1028 = vld [vmem:[#allocation2] sm:$0xff]
        %v1029 = vpack.c.bf16 %v1028, %v1028
        %v1030 = vld [vmem:[#allocation8] sm:$0xf]
        %v1031 = vld [vmem:[#allocation8 + $0x4] sm:$0xf]
        %v1032 = vld [vmem:[#allocation8 + $0x8] sm:$0xf]
        %v1033 = vld [vmem:[#allocation8 + $0xc] sm:$0xf]
        %v1034 = vld [vmem:[%s7] sm:$0x1]
        %v1036 = vperm.slane %v1034, 0
        %v1042 = vunpack.c.l.b16 %v1030
        %v1043 = vunpack.c.l.b16 %v1031
        %v1044 = vunpack.c.l.b16 %v1032
        %v1045 = vunpack.c.l.b16 %v1033
        %v1046 = vpack.c.b16 %v1043, %v1042
        %v1047 = vpack.c.b16 %v1045, %v1044
        %v1051 = vsel %vm706, %v1029, 0
        %1053 = vmatpush.bf16.msra.mxu0 0
        %1054 = vmatpush.bf16.msra.mxu0 0
        %1055 = vmatpush.bf16.msra.mxu0 0
        %1056 = vmatpush.bf16.msra.mxu0 0
        %1057 = vmatpush.bf16.msra.mxu0 0
        %1058 = vmatpush.bf16.msra.mxu0 0
        %1059 = vmatpush.bf16.msra.mxu0 %v1047
        %1060 = vmatpush.bf16.msra.mxu0 %v1046
        %1061 = vmatmul.bf16.gmra.mxu0 %v1051
        %v1062 = vpop.f32.mrf.mxu0
        %v1063 = vadd.f32 %v1036, %v1062
        %v1064 = vpop.f32.mrf.mxu0
        %1065 = vdwg.mxu0
        %v1066 = vadd.f32 %v677, %v1063
        %v1067 = vld [vmem:[%s8] sm:$0x1]
        %v1068 = vld [vmem:[%s9] sm:$0x1]
        %v1069 = vsel %vm706, %v1066, 0.0
        %1070 = vadd.xlane.f32.xlu0 %v1069
        %v1071 = vpop.xlane.xlu0 %1070
        %v1072 = vrcp.pop 32.0
        %v1073 = vmul.f32 32.0, %v1072
        %v1074 = vsub.f32 1.0, %v1073
        %v1075 = vmul.f32 %v1072, %v1074
        %v1076 = vadd.f32 %v1072, %v1075
        %vm1077 = vweird.f32 %v1072
        %v1078 = vsel %vm1077, %v1072, %v1076
        %v1079 = vmul.f32 %v1071, %v1078
        %v1080 = vsub.f32 %v1066, %v1079
        %v1081 = vmul.f32 %v1080, %v1080
        %v1082 = vsel %vm706, %v1081, 0.0
        %1083 = vadd.xlane.f32.xlu0 %v1082
        %v1084 = vpop.xlane.xlu0 %1083
        %v1085 = vmul.f32 %v1084, %v1078
        %v1086 = vadd.f32 %v1085, 1e-05
        %v1087 = vrsqrt.pop %v1086
        %v1088 = vmul.f32 %v1087, %v1086
        %v1089 = vmul.f32 %v1088, %v1087
        %v1090 = vmul.f32 0.5, %v1089
        %v1091 = vsub.f32 1.5, %v1090
        %v1092 = vmul.f32 %v1087, %v1091
        %vm1093 = vweird.f32 %v1086
        %vm1094 = vweird.f32 %v1087
        %vm1095 = vmor %vm1093, %vm1094
        %v1096 = vsel %vm1095, %v1087, %v1092
        %v1097 = vmul.f32 %v1080, %v1096
        %v1099 = vperm.slane %v1067, 0
        %v1101 = vmul.f32 %v1097, %v1099
        %v1103 = vperm.slane %v1068, 0
        %v1105 = vadd.f32 %v1101, %v1103
        %v1106 = vpack.c.bf16 %v1105, %v1105
        %v1107 = vld [vmem:[#allocation9] sm:$0xf]
        %v1108 = vld [vmem:[#allocation9 + $0x4] sm:$0xf]
        %v1109 = vld [vmem:[#allocation9 + $0x8] sm:$0xf]
        %v1110 = vld [vmem:[#allocation9 + $0xc] sm:$0xf]
        %v1111 = vld [vmem:[%s13] sm:$0x1]
        %v1113 = vperm.slane %v1111, 0
        %v1119 = vunpack.c.l.b16 %v1107
        %v1120 = vunpack.c.l.b16 %v1108
        %v1121 = vunpack.c.l.b16 %v1109
        %v1122 = vunpack.c.l.b16 %v1110
        %v1123 = vpack.c.b16 %v1120, %v1119
        %v1124 = vpack.c.b16 %v1122, %v1121
        %v1128 = vsel %vm706, %v1106, 0
        %1130 = vmatpush.bf16.msra.mxu0 0
        %1131 = vmatpush.bf16.msra.mxu0 0
        %1132 = vmatpush.bf16.msra.mxu0 0
        %1133 = vmatpush.bf16.msra.mxu0 0
        %1134 = vmatpush.bf16.msra.mxu0 0
        %1135 = vmatpush.bf16.msra.mxu0 0
        %1136 = vmatpush.bf16.msra.mxu0 %v1124
        %1137 = vmatpush.bf16.msra.mxu0 %v1123
        %1138 = vmatmul.bf16.gmra.mxu0 %v1128
        %v1139 = vpop.f32.mrf.mxu0
        %v1140 = vadd.f32 %v1113, %v1139
        %v1141 = vpop.f32.mrf.mxu0
        %1142 = vdwg.mxu0
        %v1143 = vmax.f32 %v1140, 0.0
        %v1144 = vpack.c.bf16 %v1143, %v1143
        %v1145 = vld [vmem:[%s14] sm:$0xf]
        %v1146 = vld [vmem:[%s14 + $0x4] sm:$0xf]
        %v1147 = vld [vmem:[%s14 + $0x8] sm:$0xf]
        %v1148 = vld [vmem:[%s14 + $0xc] sm:$0xf]
        %v1149 = vld [vmem:[%s14 + $0x10] sm:$0xf]
        %v1150 = vld [vmem:[%s14 + $0x14] sm:$0xf]
        %v1151 = vld [vmem:[%s14 + $0x18] sm:$0xf]
        %v1152 = vld [vmem:[%s14 + $0x1c] sm:$0xf]
        %v1153 = vld [vmem:[%s15] sm:$0x1]
        %v1155 = vperm.slane %v1153, 0
        %v1165 = vunpack.c.l.b16 %v1145
        %v1166 = vunpack.c.l.b16 %v1146
        %v1167 = vunpack.c.l.b16 %v1147
        %v1168 = vunpack.c.l.b16 %v1148
        %v1169 = vunpack.c.l.b16 %v1149
        %v1170 = vunpack.c.l.b16 %v1150
        %v1171 = vunpack.c.l.b16 %v1151
        %v1172 = vunpack.c.l.b16 %v1152
        %v1173 = vpack.c.b16 %v1166, %v1165
        %v1174 = vpack.c.b16 %v1168, %v1167
        %v1175 = vpack.c.b16 %v1170, %v1169
        %v1176 = vpack.c.b16 %v1172, %v1171
        %vm1181 = vcmask 523264
        %v1183 = vsel %vm1181, %v1144, 0
        %1185 = vmatpush.bf16.msra.mxu0 0
        %1186 = vmatpush.bf16.msra.mxu0 0
        %1187 = vmatpush.bf16.msra.mxu0 0
        %1188 = vmatpush.bf16.msra.mxu0 0
        %1189 = vmatpush.bf16.msra.mxu0 %v1176
        %1190 = vmatpush.bf16.msra.mxu0 %v1175
        %1191 = vmatpush.bf16.msra.mxu0 %v1174
        %1192 = vmatpush.bf16.msra.mxu0 %v1173
        %1193 = vmatmul.bf16.gmra.mxu0 %v1183
        %v1194 = vpop.f32.mrf.mxu0
        %v1195 = vadd.f32 %v1155, %v1194
        %v1196 = vpop.f32.mrf.mxu0
        %1197 = vdwg.mxu0
        %v1198 = vadd.f32 %v1105, %v1195
        %v1199 = vld [vmem:[%s10] sm:$0x1]
        %v1200 = vld [vmem:[%s11] sm:$0x1]
        %v1201 = vsel %vm706, %v1198, 0.0
        %1202 = vadd.xlane.f32.xlu0 %v1201
        %v1203 = vpop.xlane.xlu0 %1202
        %v1204 = vmul.f32 %v1203, %v1078
        %v1205 = vsub.f32 %v1198, %v1204
        %v1206 = vmul.f32 %v1205, %v1205
        %v1207 = vsel %vm706, %v1206, 0.0
        %1208 = vadd.xlane.f32.xlu0 %v1207
        %v1209 = vpop.xlane.xlu0 %1208
        %v1210 = vmul.f32 %v1209, %v1078
        %v1211 = vadd.f32 %v1210, 1e-05
        %v1212 = vrsqrt.pop %v1211
        %v1213 = vmul.f32 %v1212, %v1211
        %v1214 = vmul.f32 %v1213, %v1212
        %v1215 = vmul.f32 0.5, %v1214
        %v1216 = vsub.f32 1.5, %v1215
        %v1217 = vmul.f32 %v1212, %v1216
        %vm1218 = vweird.f32 %v1211
        %vm1219 = vweird.f32 %v1212
        %vm1220 = vmor %vm1218, %vm1219
        %v1221 = vsel %vm1220, %v1212, %v1217
        %v1222 = vmul.f32 %v1205, %v1221
        %v1224 = vperm.slane %v1199, 0
        %v1226 = vmul.f32 %v1222, %v1224
        %v1228 = vperm.slane %v1200, 0
        %v1230 = vadd.f32 %v1226, %v1228
        %1231 = vst.msk [vmem:[%s657] sm:$0xff] %vm706, %v1230
        %s1232 = sand.u32 %s417, 1
        %s1233 = scalar_lea.sflag [#allocation5], %s1232
        %s1234 = sand.u32 %s417, 1
        %s1235 = smul.addr %s1234, 8
        %s1236 = scalar_lea.vmem [#allocation11], %s1235
        // Predicated region
        $region101: #{tpu_custom_call.1} parent=83 // pred_check
          %p1237 = pneg %p427
        $region102: #{tpu_custom_call.1} parent=83 // pred_check_branch
          %1239 = sbr.rel (%p1237) target = $region104
        $region103: #{tpu_custom_call.1} parent=83 // pred_region
          %1241 = vsyncadd %s1233, 0
          %s1242 = sadd.s32 %s40, %s39
          %s1243 = smul.addr %s1242, 8
          %s1244 = scalar_lea.hbm %s16, %s1243
          %s1246 = sshll.u32 %s1236, 4
          %s1247 = int_to_ptr.vmem [resolvable:$true] %s1246
          %s1248 = sshll.u32 %s1244, 4
          %s1249 = int_to_ptr.hbm [resolvable:$true] %s1248
          %1251 = dma.vmem_to_hbm [thread:$0]  %s1247, 128, %s1249, %s1233
        $region104: #{tpu_custom_call.1} parent=83 // pred_fallthru
          _
      $region84: #{tpu_custom_call.1} parent=5 // pred_fallthru
        _
      %p1252 = scmp.le.s32.totalorder 2, %s30
      // Predicated region
      $region105: #{tpu_custom_call.1} parent=5 // pred_check
        %p1253 = pneg %p1252
      $region106: #{tpu_custom_call.1} parent=5 // pred_check_branch
        %1255 = sbr.rel (%p1253) target = $region108
      $region107: #{tpu_custom_call.1} parent=5 // pred_region
        %s1256 = ssub.s32 %s30, 2
        // Predicated region
        $region109: #{tpu_custom_call.1} parent=107 // pred_check
          %p1257 = pneg %p433
        $region110: #{tpu_custom_call.1} parent=107 // pred_check_branch
          %1259 = sbr.rel (%p1257) target = $region112
        $region111: #{tpu_custom_call.1} parent=107 // pred_region
          %s1260 = sand.u32 %s418, 1
          %s1261 = scalar_lea.sflag [#allocation5], %s1260
          %s1262 = sand.u32 %s418, 1
          %s1263 = smul.addr %s1262, 8
          %s1264 = scalar_lea.vmem [#allocation11], %s1263
          %1266 = dma.done %s1261, 128
        $region112: #{tpu_custom_call.1} parent=107 // pred_fallthru
          _
      $region108: #{tpu_custom_call.1} parent=5 // pred_fallthru
        _
    $region6: #{tpu_custom_call.1} parent=1 // loop_footer
      %s34 = sadd.s32 1, %s30
    $region7: #{tpu_custom_call.1} parent=1 // loop_footer_branch
      %29 = sbr.rel target = $region3
    $region8: #{tpu_custom_call.1} parent=1 // loop_exit
      _
    %1267 = vsyncpa [#allocation4], 1
    %s1268 = scalar_lea.sflag [#allocation4], 1
    %1269 = vsyncpa %s1268, 1
    %1270 = vsyncpa [#allocation7], 1
    %1271 = vsyncpa [#allocation10], 1
    %1272 = vsyncpa [#allocation5], 1
    %s1273 = scalar_lea.sflag [#allocation5], 1
    %1274 = vsyncpa %s1273, 1

</llo_original>
